<compile_context>
chip_gen: v7x
topology: tpu7x:2x2x1
jax: 0.10.0
libtpu: 0.0.40
codegen_flags: <defaults>
</compile_context>

<pallas_src>
import functools

import jax
import jax.numpy as jnp
from jax import lax
from jax.experimental import pallas as pl
from jax.experimental.pallas import tpu as pltpu


# ------------------------------ kernel -------------------------------------


def _bilstm_kernel(embp_ref,   # (T, Bt, 2E) compute dtype; row t = [emb[t] | emb[T-1-t]]
                   wih_ref,    # (2E, 8H)   compute dtype, fused gate layout (see wrapper)
                   whh_ref,    # (2H, 8H)   compute dtype, block-diag fused gate layout
                   b_ref,      # (1, 8H)    f32 (b_ih + b_hh, both directions, fused layout)
                   wfc_ref,    # (2H, Cp)   compute dtype (fc weight pre-T, lane padded)
                   bfc_ref,    # (1, Cp)    f32 (lane padded)
                   out_ref,    # (Bt, Cp)   f32 logits (lane padded)
                   xproj_ref,  # (T, Bt, 8H) f32 scratch
                   *, T, H, unroll):
    Bt = out_ref.shape[0]
    cdt = wih_ref.dtype
    G2 = 2 * H

    wih = wih_ref[...]
    whh = whh_ref[...]
    bias = b_ref[...]

    # Input projection for both directions & all timesteps.  embp[t] already pairs
    # emb[t] (forward cols) with emb[T-1-t] (backward cols), so xproj[s] is exactly
    # the input-gate contribution needed at recurrence step s.  T is small & static
    # here, so a static Python loop of (Bt, 2E) @ (2E, 8H) matmuls is fine.
    for t in range(T):
        xproj_ref[t] = (
            jnp.dot(embp_ref[t], wih, preferred_element_type=jnp.float32) + bias)

    def body(s, carry):
        h_cat, c_cat = carry                               # (Bt, 2H) f32 each
        # ONE fused recurrent matmul per step (block-diagonal whh).
        gates = xproj_ref[s] + jnp.dot(
            h_cat.astype(cdt), whh, preferred_element_type=jnp.float32)
        # Gate layout [i | f | o | g] (each 2H = [fwd | bwd]):
        # one contiguous sigmoid region (6H) + one tanh region (2H).
        sg = jax.nn.sigmoid(gates[:, : 3 * G2])
        g = jnp.tanh(gates[:, 3 * G2:])
        i_c = sg[:, :G2]
        f_c = sg[:, G2:2 * G2]
        o_c = sg[:, 2 * G2:3 * G2]
        c_cat = f_c * c_cat + i_c * g
        h_cat = o_c * jnp.tanh(c_cat)                      # stays fused [h_f | h_b]
        return h_cat, c_cat

    z = jnp.zeros((Bt, G2), jnp.float32)
    h_cat, _ = lax.fori_loop(0, T, body, (z, z), unroll=unroll)

    # Dropout(0.3) is identity in eval mode; h_cat == cat(h_fwd_final, h_bwd_final).
    out_ref[...] = (
        jnp.dot(h_cat.astype(cdt), wfc_ref[...], preferred_element_type=jnp.float32)
        + bfc_ref[...])


# --------------------------- weight plumbing --------------------------------


def _split_gates(w, H, axis):
    """PyTorch gate order [i, f, g, o] along `axis` -> tuple (i, f, o, g)."""
    sl = lambda a, b: lax.slice_in_dim(w, a, b, axis=axis)
    return sl(0, H), sl(H, 2 * H), sl(3 * H, 4 * H), sl(2 * H, 3 * H)


def _fuse_dir_weights(wf, wb, H):
    """wf/wb: (4H, K) in PyTorch layout -> (2K, 8H) fused weight.

    Rows 0:K apply to the forward-direction input, rows K:2K to the backward
    one (block-diagonal).  Columns: four 2H blocks in gate order [i, f, o, g],
    each block laid out [fwd | bwd].
    """
    K = wf.shape[1]
    gf = _split_gates(wf, H, axis=0)
    gb = _split_gates(wb, H, axis=0)
    z = jnp.zeros((K, H), wf.dtype)
    blocks = [
        jnp.concatenate(
            [jnp.concatenate([gf[k].T, z], axis=1),
             jnp.concatenate([z, gb[k].T], axis=1)], axis=0)
        for k in range(4)
    ]
    return jnp.concatenate(blocks, axis=1)                 # (2K, 8H)


def _fuse_dir_bias(bf, bb, H):
    """bf/bb: (1, 4H) PyTorch layout -> (1, 8H) fused [i|f|o|g] x [fwd|bwd]."""
    gf = _split_gates(bf, H, axis=1)
    gb = _split_gates(bb, H, axis=1)
    return jnp.concatenate(
        [jnp.concatenate([gf[k], gb[k]], axis=1) for k in range(4)], axis=1)


def _vmem_limit_bytes(resident_bytes):
    """Generation-aware scoped VMEM limit (v7x has only 64 MiB per TensorCore)."""
    try:
        cap = int(pltpu.get_tpu_info().vmem_capacity_bytes)
    except Exception:                                      # pragma: no cover
        cap = 64 << 20                                     # conservative (v7x)
    want = max(2 * resident_bytes, 32 << 20)
    ceiling = max(cap - (16 << 20), cap // 2)              # leave headroom
    return int(min(want, ceiling))


# ------------------------------ wrapper -------------------------------------


def bilstm_classifier_forward(x_ids, params, *, T, B, E, H, C,
                              compute_dtype=jnp.bfloat16, b_tile=None):
    """x_ids: (B, T) int32 token ids.  Returns (B, C) float32 logits."""
    if b_tile is None:
        b_tile = B if B <= 128 else 128
    Cp = max(128, ((C + 127) // 128) * 128)                # lane-dense logits

    # ---- glue: embedding gather + per-step fwd/bwd input pairing (plain JAX) ----
    emb_table = params["embedding"]                        # (V, E), row 0 zeroed
    embedded = jnp.take(emb_table, x_ids, axis=0)          # (B, T, E)
    emb_tm = jnp.transpose(embedded, (1, 0, 2))            # (T, B, E) time-major
    emb_pairs = jnp.concatenate([emb_tm, emb_tm[::-1]], axis=-1)   # (T, B, 2E)
    emb_pairs = emb_pairs.astype(compute_dtype)

    # ---- one-time weight layout plumbing (free XLA, outside the kernel) ----
    wih = _fuse_dir_weights(params["wih_f"], params["wih_b"], H).astype(compute_dtype)
    whh = _fuse_dir_weights(params["whh_f"], params["whh_b"], H).astype(compute_dtype)
    b_cat = _fuse_dir_bias(params["b_f"], params["b_b"], H).astype(jnp.float32)
    wfc_p = jnp.zeros((2 * H, Cp), jnp.float32).at[:, :C].set(params["wfc"].T)
    wfc_p = wfc_p.astype(compute_dtype)
    bfc_p = jnp.zeros((1, Cp), jnp.float32).at[:, :C].set(params["bfc"])

    unroll = T if T <= 16 else 8
    kernel = functools.partial(_bilstm_kernel, T=T, H=H, unroll=unroll)

    nb = pl.cdiv(B, b_tile)

    # Advisory cost estimate for XLA scheduling around the custom call.
    flops = (2 * T * B * (2 * E) * (8 * H)         # input projection (both dirs)
             + 2 * T * B * (2 * H) * (8 * H)       # fused recurrence
             + 2 * B * (2 * H) * Cp)               # fc
    transcendentals = T * B * 10 * H               # 6H sigmoid + 2H tanh(g) + 2H tanh(c)
    it = jnp.dtype(compute_dtype).itemsize
    bytes_accessed = (it * (T * B * 2 * E + 2 * E * 8 * H + 2 * H * 8 * H + 2 * H * Cp)
                      + 4 * (8 * H + Cp + B * Cp))
    cost = pl.CostEstimate(flops=flops, transcendentals=transcendentals,
                           bytes_accessed=bytes_accessed)

    # Resident VMEM per batch tile (inputs + scratch + out), generation-aware cap.
    resident = (it * (T * b_tile * 2 * E + 2 * E * 8 * H + 2 * H * 8 * H + 2 * H * Cp)
                + 4 * (8 * H + Cp)
                + 4 * T * b_tile * 8 * H            # f32 xproj scratch
                + 4 * b_tile * Cp)
    vmem_limit = _vmem_limit_bytes(resident)

    out = pl.pallas_call(
        kernel,
        out_shape=jax.ShapeDtypeStruct((B, Cp), jnp.float32),
        grid_spec=pltpu.PrefetchScalarGridSpec(
            num_scalar_prefetch=0,
            grid=(nb,),
            in_specs=[
                pl.BlockSpec((T, b_tile, 2 * E), lambda b: (0, b, 0)),
                pl.BlockSpec((2 * E, 8 * H), lambda b: (0, 0)),
                pl.BlockSpec((2 * H, 8 * H), lambda b: (0, 0)),
                pl.BlockSpec((1, 8 * H), lambda b: (0, 0)),
                pl.BlockSpec((2 * H, Cp), lambda b: (0, 0)),
                pl.BlockSpec((1, Cp), lambda b: (0, 0)),
            ],
            out_specs=pl.BlockSpec((b_tile, Cp), lambda b: (b, 0)),
            scratch_shapes=[pltpu.VMEM((T, b_tile, 8 * H), jnp.float32)],
        ),
        compiler_params=pltpu.CompilerParams(
            dimension_semantics=("parallel",),
            vmem_limit_bytes=vmem_limit),
        cost_estimate=cost,
    )(emb_pairs, wih, whh, b_cat, wfc_p, bfc_p)

    return out[:, :C]


# ------------------------------ reference -----------------------------------


def reference_forward(x_ids, params, *, T, B, E, H, C):
    """Pure-JAX reference replicating the PyTorch module's forward (f32)."""
    emb = jnp.take(params["embedding"], x_ids, axis=0)     # (B, T, E)

    def run_dir(wih, whh, b, reverse):
        def cell(carry, x_t):
            h, c = carry
            gates = x_t @ wih.T + h @ whh.T + b[0]
            i = jax.nn.sigmoid(gates[:, 0 * H:1 * H])
            f = jax.nn.sigmoid(gates[:, 1 * H:2 * H])
            g = jnp.tanh(gates[:, 2 * H:3 * H])
            o = jax.nn.sigmoid(gates[:, 3 * H:4 * H])
            c = f * c + i * g
            h = o * jnp.tanh(c)
            return (h, c), None

        xs = jnp.transpose(emb, (1, 0, 2))                 # (T, B, E)
        if reverse:
            xs = xs[::-1]
        (h, _), _ = jax.lax.scan(cell, (jnp.zeros((B, H)), jnp.zeros((B, H))), xs)
        return h

    h_f = run_dir(params["wih_f"], params["whh_f"], params["b_f"], False)
    h_b = run_dir(params["wih_b"], params["whh_b"], params["b_b"], True)
    hidden = jnp.concatenate([h_f, h_b], axis=1)
    return hidden @ params["wfc"].T + params["bfc"][0]


def init_params(key, vocab_size, E, H, C):
    ks = jax.random.split(key, 10)
    s = 1.0 / jnp.sqrt(H)
    emb = jax.random.normal(ks[0], (vocab_size, E), jnp.float32)
    emb = emb.at[0].set(0.0)                               # padding_idx=0
    u = lambda k, shape, lim: jax.random.uniform(k, shape, jnp.float32, -lim, lim)
    return {
        "embedding": emb,
        # PyTorch nn.LSTM layout: (4H, in) with gate-row order [i, f, g, o].
        "wih_f": u(ks[1], (4 * H, E), s),
        "whh_f": u(ks[2], (4 * H, H), s),
        "b_f":   u(ks[3], (1, 4 * H), s),                  # b_ih + b_hh folded
        "wih_b": u(ks[4], (4 * H, E), s),
        "whh_b": u(ks[5], (4 * H, H), s),
        "b_b":   u(ks[6], (1, 4 * H), s),
        "wfc":   u(ks[7], (C, 2 * H), 1.0 / jnp.sqrt(2 * H)),
        "bfc":   u(ks[8], (1, C), 1.0 / jnp.sqrt(2 * H)),
    }


if __name__ == "__main__":
    # Small shapes consistent with the module's forward ((B, T) int token ids).
    VOCAB, E, H, C = 50, 32, 32, 2
    B, T = 8, 8

    key = jax.random.PRNGKey(0)
    k_par, k_ids = jax.random.split(key)
    params = init_params(k_par, VOCAB, E, H, C)
    x_ids = jax.random.randint(k_ids, (B, T), 0, VOCAB, dtype=jnp.int32)

    out = bilstm_classifier_forward(x_ids, params, T=T, B=B, E=E, H=H, C=C)
    out = jax.block_until_ready(out)

    ref = reference_forward(x_ids, params, T=T, B=B, E=E, H=H, C=C)
    assert out.shape == (B, C)
    # Tolerance accounts for bf16 matmul operands (accumulation stays f32).
    err = float(jnp.max(jnp.abs(out - ref)))
    assert jnp.allclose(out, ref, rtol=5e-2, atol=5e-2), (
        f"mismatch vs JAX reference (max abs err = {err})")

    print("KERNEL_OK")
</pallas_src>

<mosaic_0001>
module attributes {stable_mosaic.version = 11 : i64} {
  func.func @_bilstm_kernel(%arg0: i32, %arg1: memref<8x8x64xbf16, #tpu.memory_space<vmem>>, %arg2: memref<64x256xbf16, #tpu.memory_space<vmem>>, %arg3: memref<64x256xbf16, #tpu.memory_space<vmem>>, %arg4: memref<1x256xf32, #tpu.memory_space<vmem>>, %arg5: memref<64x128xbf16, #tpu.memory_space<vmem>>, %arg6: memref<1x128xf32, #tpu.memory_space<vmem>>, %arg7: memref<8x128xf32, #tpu.memory_space<vmem>>, %arg8: memref<8x8x256xf32, #tpu.memory_space<vmem>>) attributes {dimension_semantics = [#tpu.dimension_semantics<parallel>], iteration_bounds = array<i64: 1>, scalar_prefetch = 0 : i64, scratch_operands = 1 : i64, tpu.core_type = #tpu.core_type<tc>, window_params = [{transform_indices = @transform_0, window_bounds = array<i64: 8, 8, 64>}, {pipeline_mode = #tpu.pipeline_mode<synchronous>, transform_indices = @transform_1, window_bounds = array<i64: 64, 256>}, {pipeline_mode = #tpu.pipeline_mode<synchronous>, transform_indices = @transform_2, window_bounds = array<i64: 64, 256>}, {pipeline_mode = #tpu.pipeline_mode<synchronous>, transform_indices = @transform_3, window_bounds = array<i64: 1, 256>}, {pipeline_mode = #tpu.pipeline_mode<synchronous>, transform_indices = @transform_4, window_bounds = array<i64: 64, 128>}, {pipeline_mode = #tpu.pipeline_mode<synchronous>, transform_indices = @transform_5, window_bounds = array<i64: 1, 128>}, {transform_indices = @transform_6, window_bounds = array<i64: 8, 128>}]} {
    %c0 = arith.constant 0 : index
    %c0_0 = arith.constant 0 : index
    %0 = vector.load %arg2[%c0, %c0_0] : memref<64x256xbf16, #tpu.memory_space<vmem>>, vector<64x256xbf16>
    %c0_1 = arith.constant 0 : index
    %c0_2 = arith.constant 0 : index
    %1 = vector.load %arg3[%c0_1, %c0_2] : memref<64x256xbf16, #tpu.memory_space<vmem>>, vector<64x256xbf16>
    %c0_3 = arith.constant 0 : index
    %c0_4 = arith.constant 0 : index
    %2 = vector.load %arg4[%c0_3, %c0_4] : memref<1x256xf32, #tpu.memory_space<vmem>>, vector<1x256xf32>
    %c0_5 = arith.constant 0 : index
    %c0_6 = arith.constant 0 : index
    %c0_7 = arith.constant 0 : index
    %3 = vector.load %arg1[%c0_5, %c0_6, %c0_7] : memref<8x8x64xbf16, #tpu.memory_space<vmem>>, vector<1x8x64xbf16>
    %4 = vector.shape_cast %3 : vector<1x8x64xbf16> to vector<8x64xbf16>
    %cst = arith.constant dense<0.000000e+00> : vector<8x256xf32>
    %5 = tpu.matmul %4, %0, %cst {dimension_numbers = #tpu.dot_dimension_numbers<[1], [0], [0], [1], [0, 0, 1, 1], [], []>} : vector<8x64xbf16>, vector<64x256xbf16>, vector<8x256xf32> -> vector<8x256xf32>
    %6 = vector.broadcast %2 : vector<1x256xf32> to vector<8x256xf32>
    %7 = arith.addf %5, %6 : vector<8x256xf32>
    %c0_8 = arith.constant 0 : index
    %c0_9 = arith.constant 0 : index
    %c0_10 = arith.constant 0 : index
    %8 = vector.load %arg8[%c0_8, %c0_9, %c0_10] : memref<8x8x256xf32, #tpu.memory_space<vmem>>, vector<1x8x256xf32>
    %9 = vector.shape_cast %8 : vector<1x8x256xf32> to vector<8x256xf32>
    %10 = vector.shape_cast %7 : vector<8x256xf32> to vector<1x8x256xf32>
    tpu.vector_store %arg8[%c0_8, %c0_9, %c0_10], %10 {strides = array<i32>} : memref<8x8x256xf32, #tpu.memory_space<vmem>>, vector<1x8x256xf32>,
    %c1 = arith.constant 1 : index
    %c0_11 = arith.constant 0 : index
    %c0_12 = arith.constant 0 : index
    %11 = vector.load %arg1[%c1, %c0_11, %c0_12] : memref<8x8x64xbf16, #tpu.memory_space<vmem>>, vector<1x8x64xbf16>
    %12 = vector.shape_cast %11 : vector<1x8x64xbf16> to vector<8x64xbf16>
    %cst_13 = arith.constant dense<0.000000e+00> : vector<8x256xf32>
    %13 = tpu.matmul %12, %0, %cst_13 {dimension_numbers = #tpu.dot_dimension_numbers<[1], [0], [0], [1], [0, 0, 1, 1], [], []>} : vector<8x64xbf16>, vector<64x256xbf16>, vector<8x256xf32> -> vector<8x256xf32>
    %14 = vector.broadcast %2 : vector<1x256xf32> to vector<8x256xf32>
    %15 = arith.addf %13, %14 : vector<8x256xf32>
    %c1_14 = arith.constant 1 : index
    %c0_15 = arith.constant 0 : index
    %c0_16 = arith.constant 0 : index
    %16 = vector.load %arg8[%c1_14, %c0_15, %c0_16] : memref<8x8x256xf32, #tpu.memory_space<vmem>>, vector<1x8x256xf32>
    %17 = vector.shape_cast %16 : vector<1x8x256xf32> to vector<8x256xf32>
    %18 = vector.shape_cast %15 : vector<8x256xf32> to vector<1x8x256xf32>
    tpu.vector_store %arg8[%c1_14, %c0_15, %c0_16], %18 {strides = array<i32>} : memref<8x8x256xf32, #tpu.memory_space<vmem>>, vector<1x8x256xf32>,
    %c2 = arith.constant 2 : index
    %c0_17 = arith.constant 0 : index
    %c0_18 = arith.constant 0 : index
    %19 = vector.load %arg1[%c2, %c0_17, %c0_18] : memref<8x8x64xbf16, #tpu.memory_space<vmem>>, vector<1x8x64xbf16>
    %20 = vector.shape_cast %19 : vector<1x8x64xbf16> to vector<8x64xbf16>
    %cst_19 = arith.constant dense<0.000000e+00> : vector<8x256xf32>
    %21 = tpu.matmul %20, %0, %cst_19 {dimension_numbers = #tpu.dot_dimension_numbers<[1], [0], [0], [1], [0, 0, 1, 1], [], []>} : vector<8x64xbf16>, vector<64x256xbf16>, vector<8x256xf32> -> vector<8x256xf32>
    %22 = vector.broadcast %2 : vector<1x256xf32> to vector<8x256xf32>
    %23 = arith.addf %21, %22 : vector<8x256xf32>
    %c2_20 = arith.constant 2 : index
    %c0_21 = arith.constant 0 : index
    %c0_22 = arith.constant 0 : index
    %24 = vector.load %arg8[%c2_20, %c0_21, %c0_22] : memref<8x8x256xf32, #tpu.memory_space<vmem>>, vector<1x8x256xf32>
    %25 = vector.shape_cast %24 : vector<1x8x256xf32> to vector<8x256xf32>
    %26 = vector.shape_cast %23 : vector<8x256xf32> to vector<1x8x256xf32>
    tpu.vector_store %arg8[%c2_20, %c0_21, %c0_22], %26 {strides = array<i32>} : memref<8x8x256xf32, #tpu.memory_space<vmem>>, vector<1x8x256xf32>,
    %c3 = arith.constant 3 : index
    %c0_23 = arith.constant 0 : index
    %c0_24 = arith.constant 0 : index
    %27 = vector.load %arg1[%c3, %c0_23, %c0_24] : memref<8x8x64xbf16, #tpu.memory_space<vmem>>, vector<1x8x64xbf16>
    %28 = vector.shape_cast %27 : vector<1x8x64xbf16> to vector<8x64xbf16>
    %cst_25 = arith.constant dense<0.000000e+00> : vector<8x256xf32>
    %29 = tpu.matmul %28, %0, %cst_25 {dimension_numbers = #tpu.dot_dimension_numbers<[1], [0], [0], [1], [0, 0, 1, 1], [], []>} : vector<8x64xbf16>, vector<64x256xbf16>, vector<8x256xf32> -> vector<8x256xf32>
    %30 = vector.broadcast %2 : vector<1x256xf32> to vector<8x256xf32>
    %31 = arith.addf %29, %30 : vector<8x256xf32>
    %c3_26 = arith.constant 3 : index
    %c0_27 = arith.constant 0 : index
    %c0_28 = arith.constant 0 : index
    %32 = vector.load %arg8[%c3_26, %c0_27, %c0_28] : memref<8x8x256xf32, #tpu.memory_space<vmem>>, vector<1x8x256xf32>
    %33 = vector.shape_cast %32 : vector<1x8x256xf32> to vector<8x256xf32>
    %34 = vector.shape_cast %31 : vector<8x256xf32> to vector<1x8x256xf32>
    tpu.vector_store %arg8[%c3_26, %c0_27, %c0_28], %34 {strides = array<i32>} : memref<8x8x256xf32, #tpu.memory_space<vmem>>, vector<1x8x256xf32>,
    %c4 = arith.constant 4 : index
    %c0_29 = arith.constant 0 : index
    %c0_30 = arith.constant 0 : index
    %35 = vector.load %arg1[%c4, %c0_29, %c0_30] : memref<8x8x64xbf16, #tpu.memory_space<vmem>>, vector<1x8x64xbf16>
    %36 = vector.shape_cast %35 : vector<1x8x64xbf16> to vector<8x64xbf16>
    %cst_31 = arith.constant dense<0.000000e+00> : vector<8x256xf32>
    %37 = tpu.matmul %36, %0, %cst_31 {dimension_numbers = #tpu.dot_dimension_numbers<[1], [0], [0], [1], [0, 0, 1, 1], [], []>} : vector<8x64xbf16>, vector<64x256xbf16>, vector<8x256xf32> -> vector<8x256xf32>
    %38 = vector.broadcast %2 : vector<1x256xf32> to vector<8x256xf32>
    %39 = arith.addf %37, %38 : vector<8x256xf32>
    %c4_32 = arith.constant 4 : index
    %c0_33 = arith.constant 0 : index
    %c0_34 = arith.constant 0 : index
    %40 = vector.load %arg8[%c4_32, %c0_33, %c0_34] : memref<8x8x256xf32, #tpu.memory_space<vmem>>, vector<1x8x256xf32>
    %41 = vector.shape_cast %40 : vector<1x8x256xf32> to vector<8x256xf32>
    %42 = vector.shape_cast %39 : vector<8x256xf32> to vector<1x8x256xf32>
    tpu.vector_store %arg8[%c4_32, %c0_33, %c0_34], %42 {strides = array<i32>} : memref<8x8x256xf32, #tpu.memory_space<vmem>>, vector<1x8x256xf32>,
    %c5 = arith.constant 5 : index
    %c0_35 = arith.constant 0 : index
    %c0_36 = arith.constant 0 : index
    %43 = vector.load %arg1[%c5, %c0_35, %c0_36] : memref<8x8x64xbf16, #tpu.memory_space<vmem>>, vector<1x8x64xbf16>
    %44 = vector.shape_cast %43 : vector<1x8x64xbf16> to vector<8x64xbf16>
    %cst_37 = arith.constant dense<0.000000e+00> : vector<8x256xf32>
    %45 = tpu.matmul %44, %0, %cst_37 {dimension_numbers = #tpu.dot_dimension_numbers<[1], [0], [0], [1], [0, 0, 1, 1], [], []>} : vector<8x64xbf16>, vector<64x256xbf16>, vector<8x256xf32> -> vector<8x256xf32>
    %46 = vector.broadcast %2 : vector<1x256xf32> to vector<8x256xf32>
    %47 = arith.addf %45, %46 : vector<8x256xf32>
    %c5_38 = arith.constant 5 : index
    %c0_39 = arith.constant 0 : index
    %c0_40 = arith.constant 0 : index
    %48 = vector.load %arg8[%c5_38, %c0_39, %c0_40] : memref<8x8x256xf32, #tpu.memory_space<vmem>>, vector<1x8x256xf32>
    %49 = vector.shape_cast %48 : vector<1x8x256xf32> to vector<8x256xf32>
    %50 = vector.shape_cast %47 : vector<8x256xf32> to vector<1x8x256xf32>
    tpu.vector_store %arg8[%c5_38, %c0_39, %c0_40], %50 {strides = array<i32>} : memref<8x8x256xf32, #tpu.memory_space<vmem>>, vector<1x8x256xf32>,
    %c6 = arith.constant 6 : index
    %c0_41 = arith.constant 0 : index
    %c0_42 = arith.constant 0 : index
    %51 = vector.load %arg1[%c6, %c0_41, %c0_42] : memref<8x8x64xbf16, #tpu.memory_space<vmem>>, vector<1x8x64xbf16>
    %52 = vector.shape_cast %51 : vector<1x8x64xbf16> to vector<8x64xbf16>
    %cst_43 = arith.constant dense<0.000000e+00> : vector<8x256xf32>
    %53 = tpu.matmul %52, %0, %cst_43 {dimension_numbers = #tpu.dot_dimension_numbers<[1], [0], [0], [1], [0, 0, 1, 1], [], []>} : vector<8x64xbf16>, vector<64x256xbf16>, vector<8x256xf32> -> vector<8x256xf32>
    %54 = vector.broadcast %2 : vector<1x256xf32> to vector<8x256xf32>
    %55 = arith.addf %53, %54 : vector<8x256xf32>
    %c6_44 = arith.constant 6 : index
    %c0_45 = arith.constant 0 : index
    %c0_46 = arith.constant 0 : index
    %56 = vector.load %arg8[%c6_44, %c0_45, %c0_46] : memref<8x8x256xf32, #tpu.memory_space<vmem>>, vector<1x8x256xf32>
    %57 = vector.shape_cast %56 : vector<1x8x256xf32> to vector<8x256xf32>
    %58 = vector.shape_cast %55 : vector<8x256xf32> to vector<1x8x256xf32>
    tpu.vector_store %arg8[%c6_44, %c0_45, %c0_46], %58 {strides = array<i32>} : memref<8x8x256xf32, #tpu.memory_space<vmem>>, vector<1x8x256xf32>,
    %c7 = arith.constant 7 : index
    %c0_47 = arith.constant 0 : index
    %c0_48 = arith.constant 0 : index
    %59 = vector.load %arg1[%c7, %c0_47, %c0_48] : memref<8x8x64xbf16, #tpu.memory_space<vmem>>, vector<1x8x64xbf16>
    %60 = vector.shape_cast %59 : vector<1x8x64xbf16> to vector<8x64xbf16>
    %cst_49 = arith.constant dense<0.000000e+00> : vector<8x256xf32>
    %61 = tpu.matmul %60, %0, %cst_49 {dimension_numbers = #tpu.dot_dimension_numbers<[1], [0], [0], [1], [0, 0, 1, 1], [], []>} : vector<8x64xbf16>, vector<64x256xbf16>, vector<8x256xf32> -> vector<8x256xf32>
    %62 = vector.broadcast %2 : vector<1x256xf32> to vector<8x256xf32>
    %63 = arith.addf %61, %62 : vector<8x256xf32>
    %c7_50 = arith.constant 7 : index
    %c0_51 = arith.constant 0 : index
    %c0_52 = arith.constant 0 : index
    %64 = vector.load %arg8[%c7_50, %c0_51, %c0_52] : memref<8x8x256xf32, #tpu.memory_space<vmem>>, vector<1x8x256xf32>
    %65 = vector.shape_cast %64 : vector<1x8x256xf32> to vector<8x256xf32>
    %66 = vector.shape_cast %63 : vector<8x256xf32> to vector<1x8x256xf32>
    tpu.vector_store %arg8[%c7_50, %c0_51, %c0_52], %66 {strides = array<i32>} : memref<8x8x256xf32, #tpu.memory_space<vmem>>, vector<1x8x256xf32>,
    %cst_53 = arith.constant 0.000000e+00 : f32
    %67 = vector.broadcast %cst_53 : f32 to vector<8x64xf32>
    %c0_i32 = arith.constant 0 : i32
    %68 = arith.index_cast %c0_i32 : i32 to index
    %c0_54 = arith.constant 0 : index
    %c0_55 = arith.constant 0 : index
    %69 = vector.load %arg8[%68, %c0_54, %c0_55] : memref<8x8x256xf32, #tpu.memory_space<vmem>>, vector<1x8x256xf32>
    %70 = vector.shape_cast %69 : vector<1x8x256xf32> to vector<8x256xf32>
    %71 = arith.truncf %67 : vector<8x64xf32> to vector<8x64xbf16>
    %cst_56 = arith.constant dense<0.000000e+00> : vector<8x256xf32>
    %72 = tpu.matmul %71, %1, %cst_56 {dimension_numbers = #tpu.dot_dimension_numbers<[1], [0], [0], [1], [0, 0, 1, 1], [], []>} : vector<8x64xbf16>, vector<64x256xbf16>, vector<8x256xf32> -> vector<8x256xf32>
    %73 = arith.addf %70, %72 : vector<8x256xf32>
    %74 = vector.extract_strided_slice %73 {offsets = [0, 0], sizes = [8, 192], strides = [1, 1]} : vector<8x256xf32> to vector<8x192xf32>
    %75 = arith.negf %74 : vector<8x192xf32>
    %76 = math.exp %75 : vector<8x192xf32>
    %cst_57 = arith.constant 1.000000e+00 : f32
    %77 = vector.broadcast %cst_57 : f32 to vector<8x192xf32>
    %78 = arith.addf %77, %76 : vector<8x192xf32>
    %79 = arith.divf %77, %78 : vector<8x192xf32>
    %80 = vector.extract_strided_slice %73 {offsets = [0, 192], sizes = [8, 64], strides = [1, 1]} : vector<8x256xf32> to vector<8x64xf32>
    %81 = math.tanh %80 : vector<8x64xf32>
    %82 = vector.extract_strided_slice %79 {offsets = [0, 0], sizes = [8, 64], strides = [1, 1]} : vector<8x192xf32> to vector<8x64xf32>
    %83 = vector.extract_strided_slice %79 {offsets = [0, 64], sizes = [8, 64], strides = [1, 1]} : vector<8x192xf32> to vector<8x64xf32>
    %84 = vector.extract_strided_slice %79 {offsets = [0, 128], sizes = [8, 64], strides = [1, 1]} : vector<8x192xf32> to vector<8x64xf32>
    %85 = arith.mulf %83, %67 : vector<8x64xf32>
    %86 = arith.mulf %82, %81 : vector<8x64xf32>
    %87 = arith.addf %85, %86 : vector<8x64xf32>
    %88 = math.tanh %87 : vector<8x64xf32>
    %89 = arith.mulf %84, %88 : vector<8x64xf32>
    %c1_i32 = arith.constant 1 : i32
    %90 = arith.index_cast %c1_i32 : i32 to index
    %c0_58 = arith.constant 0 : index
    %c0_59 = arith.constant 0 : index
    %91 = vector.load %arg8[%90, %c0_58, %c0_59] : memref<8x8x256xf32, #tpu.memory_space<vmem>>, vector<1x8x256xf32>
    %92 = vector.shape_cast %91 : vector<1x8x256xf32> to vector<8x256xf32>
    %93 = arith.truncf %89 : vector<8x64xf32> to vector<8x64xbf16>
    %cst_60 = arith.constant dense<0.000000e+00> : vector<8x256xf32>
    %94 = tpu.matmul %93, %1, %cst_60 {dimension_numbers = #tpu.dot_dimension_numbers<[1], [0], [0], [1], [0, 0, 1, 1], [], []>} : vector<8x64xbf16>, vector<64x256xbf16>, vector<8x256xf32> -> vector<8x256xf32>
    %95 = arith.addf %92, %94 : vector<8x256xf32>
    %96 = vector.extract_strided_slice %95 {offsets = [0, 0], sizes = [8, 192], strides = [1, 1]} : vector<8x256xf32> to vector<8x192xf32>
    %97 = arith.negf %96 : vector<8x192xf32>
    %98 = math.exp %97 : vector<8x192xf32>
    %cst_61 = arith.constant 1.000000e+00 : f32
    %99 = vector.broadcast %cst_61 : f32 to vector<8x192xf32>
    %100 = arith.addf %99, %98 : vector<8x192xf32>
    %101 = arith.divf %99, %100 : vector<8x192xf32>
    %102 = vector.extract_strided_slice %95 {offsets = [0, 192], sizes = [8, 64], strides = [1, 1]} : vector<8x256xf32> to vector<8x64xf32>
    %103 = math.tanh %102 : vector<8x64xf32>
    %104 = vector.extract_strided_slice %101 {offsets = [0, 0], sizes = [8, 64], strides = [1, 1]} : vector<8x192xf32> to vector<8x64xf32>
    %105 = vector.extract_strided_slice %101 {offsets = [0, 64], sizes = [8, 64], strides = [1, 1]} : vector<8x192xf32> to vector<8x64xf32>
    %106 = vector.extract_strided_slice %101 {offsets = [0, 128], sizes = [8, 64], strides = [1, 1]} : vector<8x192xf32> to vector<8x64xf32>
    %107 = arith.mulf %105, %87 : vector<8x64xf32>
    %108 = arith.mulf %104, %103 : vector<8x64xf32>
    %109 = arith.addf %107, %108 : vector<8x64xf32>
    %110 = math.tanh %109 : vector<8x64xf32>
    %111 = arith.mulf %106, %110 : vector<8x64xf32>
    %c2_i32 = arith.constant 2 : i32
    %112 = arith.index_cast %c2_i32 : i32 to index
    %c0_62 = arith.constant 0 : index
    %c0_63 = arith.constant 0 : index
    %113 = vector.load %arg8[%112, %c0_62, %c0_63] : memref<8x8x256xf32, #tpu.memory_space<vmem>>, vector<1x8x256xf32>
    %114 = vector.shape_cast %113 : vector<1x8x256xf32> to vector<8x256xf32>
    %115 = arith.truncf %111 : vector<8x64xf32> to vector<8x64xbf16>
    %cst_64 = arith.constant dense<0.000000e+00> : vector<8x256xf32>
    %116 = tpu.matmul %115, %1, %cst_64 {dimension_numbers = #tpu.dot_dimension_numbers<[1], [0], [0], [1], [0, 0, 1, 1], [], []>} : vector<8x64xbf16>, vector<64x256xbf16>, vector<8x256xf32> -> vector<8x256xf32>
    %117 = arith.addf %114, %116 : vector<8x256xf32>
    %118 = vector.extract_strided_slice %117 {offsets = [0, 0], sizes = [8, 192], strides = [1, 1]} : vector<8x256xf32> to vector<8x192xf32>
    %119 = arith.negf %118 : vector<8x192xf32>
    %120 = math.exp %119 : vector<8x192xf32>
    %cst_65 = arith.constant 1.000000e+00 : f32
    %121 = vector.broadcast %cst_65 : f32 to vector<8x192xf32>
    %122 = arith.addf %121, %120 : vector<8x192xf32>
    %123 = arith.divf %121, %122 : vector<8x192xf32>
    %124 = vector.extract_strided_slice %117 {offsets = [0, 192], sizes = [8, 64], strides = [1, 1]} : vector<8x256xf32> to vector<8x64xf32>
    %125 = math.tanh %124 : vector<8x64xf32>
    %126 = vector.extract_strided_slice %123 {offsets = [0, 0], sizes = [8, 64], strides = [1, 1]} : vector<8x192xf32> to vector<8x64xf32>
    %127 = vector.extract_strided_slice %123 {offsets = [0, 64], sizes = [8, 64], strides = [1, 1]} : vector<8x192xf32> to vector<8x64xf32>
    %128 = vector.extract_strided_slice %123 {offsets = [0, 128], sizes = [8, 64], strides = [1, 1]} : vector<8x192xf32> to vector<8x64xf32>
    %129 = arith.mulf %127, %109 : vector<8x64xf32>
    %130 = arith.mulf %126, %125 : vector<8x64xf32>
    %131 = arith.addf %129, %130 : vector<8x64xf32>
    %132 = math.tanh %131 : vector<8x64xf32>
    %133 = arith.mulf %128, %132 : vector<8x64xf32>
    %c3_i32 = arith.constant 3 : i32
    %134 = arith.index_cast %c3_i32 : i32 to index
    %c0_66 = arith.constant 0 : index
    %c0_67 = arith.constant 0 : index
    %135 = vector.load %arg8[%134, %c0_66, %c0_67] : memref<8x8x256xf32, #tpu.memory_space<vmem>>, vector<1x8x256xf32>
    %136 = vector.shape_cast %135 : vector<1x8x256xf32> to vector<8x256xf32>
    %137 = arith.truncf %133 : vector<8x64xf32> to vector<8x64xbf16>
    %cst_68 = arith.constant dense<0.000000e+00> : vector<8x256xf32>
    %138 = tpu.matmul %137, %1, %cst_68 {dimension_numbers = #tpu.dot_dimension_numbers<[1], [0], [0], [1], [0, 0, 1, 1], [], []>} : vector<8x64xbf16>, vector<64x256xbf16>, vector<8x256xf32> -> vector<8x256xf32>
    %139 = arith.addf %136, %138 : vector<8x256xf32>
    %140 = vector.extract_strided_slice %139 {offsets = [0, 0], sizes = [8, 192], strides = [1, 1]} : vector<8x256xf32> to vector<8x192xf32>
    %141 = arith.negf %140 : vector<8x192xf32>
    %142 = math.exp %141 : vector<8x192xf32>
    %cst_69 = arith.constant 1.000000e+00 : f32
    %143 = vector.broadcast %cst_69 : f32 to vector<8x192xf32>
    %144 = arith.addf %143, %142 : vector<8x192xf32>
    %145 = arith.divf %143, %144 : vector<8x192xf32>
    %146 = vector.extract_strided_slice %139 {offsets = [0, 192], sizes = [8, 64], strides = [1, 1]} : vector<8x256xf32> to vector<8x64xf32>
    %147 = math.tanh %146 : vector<8x64xf32>
    %148 = vector.extract_strided_slice %145 {offsets = [0, 0], sizes = [8, 64], strides = [1, 1]} : vector<8x192xf32> to vector<8x64xf32>
    %149 = vector.extract_strided_slice %145 {offsets = [0, 64], sizes = [8, 64], strides = [1, 1]} : vector<8x192xf32> to vector<8x64xf32>
    %150 = vector.extract_strided_slice %145 {offsets = [0, 128], sizes = [8, 64], strides = [1, 1]} : vector<8x192xf32> to vector<8x64xf32>
    %151 = arith.mulf %149, %131 : vector<8x64xf32>
    %152 = arith.mulf %148, %147 : vector<8x64xf32>
    %153 = arith.addf %151, %152 : vector<8x64xf32>
    %154 = math.tanh %153 : vector<8x64xf32>
    %155 = arith.mulf %150, %154 : vector<8x64xf32>
    %c4_i32 = arith.constant 4 : i32
    %156 = arith.index_cast %c4_i32 : i32 to index
    %c0_70 = arith.constant 0 : index
    %c0_71 = arith.constant 0 : index
    %157 = vector.load %arg8[%156, %c0_70, %c0_71] : memref<8x8x256xf32, #tpu.memory_space<vmem>>, vector<1x8x256xf32>
    %158 = vector.shape_cast %157 : vector<1x8x256xf32> to vector<8x256xf32>
    %159 = arith.truncf %155 : vector<8x64xf32> to vector<8x64xbf16>
    %cst_72 = arith.constant dense<0.000000e+00> : vector<8x256xf32>
    %160 = tpu.matmul %159, %1, %cst_72 {dimension_numbers = #tpu.dot_dimension_numbers<[1], [0], [0], [1], [0, 0, 1, 1], [], []>} : vector<8x64xbf16>, vector<64x256xbf16>, vector<8x256xf32> -> vector<8x256xf32>
    %161 = arith.addf %158, %160 : vector<8x256xf32>
    %162 = vector.extract_strided_slice %161 {offsets = [0, 0], sizes = [8, 192], strides = [1, 1]} : vector<8x256xf32> to vector<8x192xf32>
    %163 = arith.negf %162 : vector<8x192xf32>
    %164 = math.exp %163 : vector<8x192xf32>
    %cst_73 = arith.constant 1.000000e+00 : f32
    %165 = vector.broadcast %cst_73 : f32 to vector<8x192xf32>
    %166 = arith.addf %165, %164 : vector<8x192xf32>
    %167 = arith.divf %165, %166 : vector<8x192xf32>
    %168 = vector.extract_strided_slice %161 {offsets = [0, 192], sizes = [8, 64], strides = [1, 1]} : vector<8x256xf32> to vector<8x64xf32>
    %169 = math.tanh %168 : vector<8x64xf32>
    %170 = vector.extract_strided_slice %167 {offsets = [0, 0], sizes = [8, 64], strides = [1, 1]} : vector<8x192xf32> to vector<8x64xf32>
    %171 = vector.extract_strided_slice %167 {offsets = [0, 64], sizes = [8, 64], strides = [1, 1]} : vector<8x192xf32> to vector<8x64xf32>
    %172 = vector.extract_strided_slice %167 {offsets = [0, 128], sizes = [8, 64], strides = [1, 1]} : vector<8x192xf32> to vector<8x64xf32>
    %173 = arith.mulf %171, %153 : vector<8x64xf32>
    %174 = arith.mulf %170, %169 : vector<8x64xf32>
    %175 = arith.addf %173, %174 : vector<8x64xf32>
    %176 = math.tanh %175 : vector<8x64xf32>
    %177 = arith.mulf %172, %176 : vector<8x64xf32>
    %c5_i32 = arith.constant 5 : i32
    %178 = arith.index_cast %c5_i32 : i32 to index
    %c0_74 = arith.constant 0 : index
    %c0_75 = arith.constant 0 : index
    %179 = vector.load %arg8[%178, %c0_74, %c0_75] : memref<8x8x256xf32, #tpu.memory_space<vmem>>, vector<1x8x256xf32>
    %180 = vector.shape_cast %179 : vector<1x8x256xf32> to vector<8x256xf32>
    %181 = arith.truncf %177 : vector<8x64xf32> to vector<8x64xbf16>
    %cst_76 = arith.constant dense<0.000000e+00> : vector<8x256xf32>
    %182 = tpu.matmul %181, %1, %cst_76 {dimension_numbers = #tpu.dot_dimension_numbers<[1], [0], [0], [1], [0, 0, 1, 1], [], []>} : vector<8x64xbf16>, vector<64x256xbf16>, vector<8x256xf32> -> vector<8x256xf32>
    %183 = arith.addf %180, %182 : vector<8x256xf32>
    %184 = vector.extract_strided_slice %183 {offsets = [0, 0], sizes = [8, 192], strides = [1, 1]} : vector<8x256xf32> to vector<8x192xf32>
    %185 = arith.negf %184 : vector<8x192xf32>
    %186 = math.exp %185 : vector<8x192xf32>
    %cst_77 = arith.constant 1.000000e+00 : f32
    %187 = vector.broadcast %cst_77 : f32 to vector<8x192xf32>
    %188 = arith.addf %187, %186 : vector<8x192xf32>
    %189 = arith.divf %187, %188 : vector<8x192xf32>
    %190 = vector.extract_strided_slice %183 {offsets = [0, 192], sizes = [8, 64], strides = [1, 1]} : vector<8x256xf32> to vector<8x64xf32>
    %191 = math.tanh %190 : vector<8x64xf32>
    %192 = vector.extract_strided_slice %189 {offsets = [0, 0], sizes = [8, 64], strides = [1, 1]} : vector<8x192xf32> to vector<8x64xf32>
    %193 = vector.extract_strided_slice %189 {offsets = [0, 64], sizes = [8, 64], strides = [1, 1]} : vector<8x192xf32> to vector<8x64xf32>
    %194 = vector.extract_strided_slice %189 {offsets = [0, 128], sizes = [8, 64], strides = [1, 1]} : vector<8x192xf32> to vector<8x64xf32>
    %195 = arith.mulf %193, %175 : vector<8x64xf32>
    %196 = arith.mulf %192, %191 : vector<8x64xf32>
    %197 = arith.addf %195, %196 : vector<8x64xf32>
    %198 = math.tanh %197 : vector<8x64xf32>
    %199 = arith.mulf %194, %198 : vector<8x64xf32>
    %c6_i32 = arith.constant 6 : i32
    %200 = arith.index_cast %c6_i32 : i32 to index
    %c0_78 = arith.constant 0 : index
    %c0_79 = arith.constant 0 : index
    %201 = vector.load %arg8[%200, %c0_78, %c0_79] : memref<8x8x256xf32, #tpu.memory_space<vmem>>, vector<1x8x256xf32>
    %202 = vector.shape_cast %201 : vector<1x8x256xf32> to vector<8x256xf32>
    %203 = arith.truncf %199 : vector<8x64xf32> to vector<8x64xbf16>
    %cst_80 = arith.constant dense<0.000000e+00> : vector<8x256xf32>
    %204 = tpu.matmul %203, %1, %cst_80 {dimension_numbers = #tpu.dot_dimension_numbers<[1], [0], [0], [1], [0, 0, 1, 1], [], []>} : vector<8x64xbf16>, vector<64x256xbf16>, vector<8x256xf32> -> vector<8x256xf32>
    %205 = arith.addf %202, %204 : vector<8x256xf32>
    %206 = vector.extract_strided_slice %205 {offsets = [0, 0], sizes = [8, 192], strides = [1, 1]} : vector<8x256xf32> to vector<8x192xf32>
    %207 = arith.negf %206 : vector<8x192xf32>
    %208 = math.exp %207 : vector<8x192xf32>
    %cst_81 = arith.constant 1.000000e+00 : f32
    %209 = vector.broadcast %cst_81 : f32 to vector<8x192xf32>
    %210 = arith.addf %209, %208 : vector<8x192xf32>
    %211 = arith.divf %209, %210 : vector<8x192xf32>
    %212 = vector.extract_strided_slice %205 {offsets = [0, 192], sizes = [8, 64], strides = [1, 1]} : vector<8x256xf32> to vector<8x64xf32>
    %213 = math.tanh %212 : vector<8x64xf32>
    %214 = vector.extract_strided_slice %211 {offsets = [0, 0], sizes = [8, 64], strides = [1, 1]} : vector<8x192xf32> to vector<8x64xf32>
    %215 = vector.extract_strided_slice %211 {offsets = [0, 64], sizes = [8, 64], strides = [1, 1]} : vector<8x192xf32> to vector<8x64xf32>
    %216 = vector.extract_strided_slice %211 {offsets = [0, 128], sizes = [8, 64], strides = [1, 1]} : vector<8x192xf32> to vector<8x64xf32>
    %217 = arith.mulf %215, %197 : vector<8x64xf32>
    %218 = arith.mulf %214, %213 : vector<8x64xf32>
    %219 = arith.addf %217, %218 : vector<8x64xf32>
    %220 = math.tanh %219 : vector<8x64xf32>
    %221 = arith.mulf %216, %220 : vector<8x64xf32>
    %c7_i32 = arith.constant 7 : i32
    %222 = arith.index_cast %c7_i32 : i32 to index
    %c0_82 = arith.constant 0 : index
    %c0_83 = arith.constant 0 : index
    %223 = vector.load %arg8[%222, %c0_82, %c0_83] : memref<8x8x256xf32, #tpu.memory_space<vmem>>, vector<1x8x256xf32>
    %224 = vector.shape_cast %223 : vector<1x8x256xf32> to vector<8x256xf32>
    %225 = arith.truncf %221 : vector<8x64xf32> to vector<8x64xbf16>
    %cst_84 = arith.constant dense<0.000000e+00> : vector<8x256xf32>
    %226 = tpu.matmul %225, %1, %cst_84 {dimension_numbers = #tpu.dot_dimension_numbers<[1], [0], [0], [1], [0, 0, 1, 1], [], []>} : vector<8x64xbf16>, vector<64x256xbf16>, vector<8x256xf32> -> vector<8x256xf32>
    %227 = arith.addf %224, %226 : vector<8x256xf32>
    %228 = vector.extract_strided_slice %227 {offsets = [0, 0], sizes = [8, 192], strides = [1, 1]} : vector<8x256xf32> to vector<8x192xf32>
    %229 = arith.negf %228 : vector<8x192xf32>
    %230 = math.exp %229 : vector<8x192xf32>
    %cst_85 = arith.constant 1.000000e+00 : f32
    %231 = vector.broadcast %cst_85 : f32 to vector<8x192xf32>
    %232 = arith.addf %231, %230 : vector<8x192xf32>
    %233 = arith.divf %231, %232 : vector<8x192xf32>
    %234 = vector.extract_strided_slice %227 {offsets = [0, 192], sizes = [8, 64], strides = [1, 1]} : vector<8x256xf32> to vector<8x64xf32>
    %235 = math.tanh %234 : vector<8x64xf32>
    %236 = vector.extract_strided_slice %233 {offsets = [0, 0], sizes = [8, 64], strides = [1, 1]} : vector<8x192xf32> to vector<8x64xf32>
    %237 = vector.extract_strided_slice %233 {offsets = [0, 64], sizes = [8, 64], strides = [1, 1]} : vector<8x192xf32> to vector<8x64xf32>
    %238 = vector.extract_strided_slice %233 {offsets = [0, 128], sizes = [8, 64], strides = [1, 1]} : vector<8x192xf32> to vector<8x64xf32>
    %239 = arith.mulf %237, %219 : vector<8x64xf32>
    %240 = arith.mulf %236, %235 : vector<8x64xf32>
    %241 = arith.addf %239, %240 : vector<8x64xf32>
    %242 = math.tanh %241 : vector<8x64xf32>
    %243 = arith.mulf %238, %242 : vector<8x64xf32>
    %c8_i32 = arith.constant 8 : i32
    %244 = arith.truncf %243 : vector<8x64xf32> to vector<8x64xbf16>
    %c0_86 = arith.constant 0 : index
    %c0_87 = arith.constant 0 : index
    %245 = vector.load %arg5[%c0_86, %c0_87] : memref<64x128xbf16, #tpu.memory_space<vmem>>, vector<64x128xbf16>
    %cst_88 = arith.constant dense<0.000000e+00> : vector<8x128xf32>
    %246 = tpu.matmul %244, %245, %cst_88 {dimension_numbers = #tpu.dot_dimension_numbers<[1], [0], [0], [1], [0, 0, 1, 1], [], []>} : vector<8x64xbf16>, vector<64x128xbf16>, vector<8x128xf32> -> vector<8x128xf32>
    %c0_89 = arith.constant 0 : index
    %c0_90 = arith.constant 0 : index
    %247 = vector.load %arg6[%c0_89, %c0_90] : memref<1x128xf32, #tpu.memory_space<vmem>>, vector<1x128xf32>
    %248 = vector.broadcast %247 : vector<1x128xf32> to vector<8x128xf32>
    %249 = arith.addf %246, %248 : vector<8x128xf32>
    %c0_91 = arith.constant 0 : index
    %c0_92 = arith.constant 0 : index
    %250 = vector.load %arg7[%c0_91, %c0_92] : memref<8x128xf32, #tpu.memory_space<vmem>>, vector<8x128xf32>
    tpu.vector_store %arg7[%c0_91, %c0_92], %249 {strides = array<i32>} : memref<8x128xf32, #tpu.memory_space<vmem>>, vector<8x128xf32>,
    return
  }
  func.func @transform_0(%arg0: i32) -> (i32, i32, i32) {
    %c0_i32 = arith.constant 0 : i32
    %c0_i32_0 = arith.constant 0 : i32
    %c0_i32_1 = arith.constant 0 : i32
    return %c0_i32, %arg0, %c0_i32_0 : i32, i32, i32
  }
  func.func @transform_1(%arg0: i32) -> (i32, i32) {
    %c0_i32 = arith.constant 0 : i32
    %c0_i32_0 = arith.constant 0 : i32
    %c0_i32_1 = arith.constant 0 : i32
    return %c0_i32, %c0_i32_0 : i32, i32
  }
  func.func @transform_2(%arg0: i32) -> (i32, i32) {
    %c0_i32 = arith.constant 0 : i32
    %c0_i32_0 = arith.constant 0 : i32
    %c0_i32_1 = arith.constant 0 : i32
    return %c0_i32, %c0_i32_0 : i32, i32
  }
  func.func @transform_3(%arg0: i32) -> (i32, i32) {
    %c0_i32 = arith.constant 0 : i32
    %c0_i32_0 = arith.constant 0 : i32
    %c0_i32_1 = arith.constant 0 : i32
    return %c0_i32, %c0_i32_0 : i32, i32
  }
  func.func @transform_4(%arg0: i32) -> (i32, i32) {
    %c0_i32 = arith.constant 0 : i32
    %c0_i32_0 = arith.constant 0 : i32
    %c0_i32_1 = arith.constant 0 : i32
    return %c0_i32, %c0_i32_0 : i32, i32
  }
  func.func @transform_5(%arg0: i32) -> (i32, i32) {
    %c0_i32 = arith.constant 0 : i32
    %c0_i32_0 = arith.constant 0 : i32
    %c0_i32_1 = arith.constant 0 : i32
    return %c0_i32, %c0_i32_0 : i32, i32
  }
  func.func @transform_6(%arg0: i32) -> (i32, i32) {
    %c0_i32 = arith.constant 0 : i32
    %c0_i32_0 = arith.constant 0 : i32
    return %arg0, %c0_i32 : i32, i32
  }
}

</mosaic_0001>

<llo_original>
// kernel: tpu_custom_call.1
$region0: #{tpu_custom_call.1}
  #allocation0 [shape = 'u32[]', space=smem, size = 0x4, offset = 0x4, fixed_abs, tag = 'smem constant byte address 0x4 - core index']
  #allocation1 [shape = 'u32[144,128]{1,0:T(1,128)}', space=vmem, size = 0x12000, scoped, tag = 'internal scratch']
  #allocation2 [shape = 'f32[8,8,256]{2,1,0:T(8,128)}', space=vmem, size = 0x10000, scoped, tag = 'scratch operand']
  %s0 = inlined_call_operand.hbm [shape: bf16[8,8,64], index: 0, kind: input, shape index: {}]
  %s1 = inlined_call_operand.hbm [shape: bf16[64,256], index: 1, kind: input, shape index: {}]
  %s2 = inlined_call_operand.hbm [shape: bf16[64,256], index: 2, kind: input, shape index: {}]
  %s3 = inlined_call_operand.vmem [shape: f32[1,256], index: 3, kind: input, shape index: {}]
  %s4 = inlined_call_operand.hbm [shape: bf16[64,128], index: 4, kind: input, shape index: {}]
  %s5 = inlined_call_operand.vmem [shape: f32[1,128], index: 5, kind: input, shape index: {}]
  %s6 = inlined_call_operand.hbm [shape: f32[8,128], index: 6, kind: output, shape index: {}]
  %s7 = sld [smem:[#allocation0]]
  $region50: #{tpu_custom_call.1} parent=0
    _
  %s9 = ssub.s32 1, %s7
  %s10 = scalar_select 0, %s9, %s7
  $region1: #{tpu_custom_call.1} parent=0
    #allocation3 [shape = 'u8[16384]{0}', space=vmem, size = 0x4000, scoped, tag = 'input window, operand 0, single buffered']
    #allocation4 [shape = 's32[1]{0}', space=sflag, size = 0x4, scoped, tag = 'scoped memory for tpu_custom_call.1']
    #allocation5 [shape = 's32[1]{0}', space=sflag, size = 0x4, scoped, tag = 'scoped memory for tpu_custom_call.1']
    #allocation6 [shape = 'u8[32768]{0}', space=vmem, size = 0x8000, scoped, tag = 'input window, operand 1, single buffered']
    #allocation7 [shape = 's32[1]{0}', space=sflag, size = 0x4, scoped, tag = 'scoped memory for tpu_custom_call.1']
    #allocation8 [shape = 'u8[32768]{0}', space=vmem, size = 0x8000, scoped, tag = 'input window, operand 2, single buffered']
    #allocation9 [shape = 'u8[16384]{0}', space=vmem, size = 0x4000, scoped, tag = 'input window, operand 4, single buffered']
    #allocation10 [shape = 's32[1]{0}', space=sflag, size = 0x4, scoped, tag = 'scoped memory for tpu_custom_call.1']
    #allocation11 [shape = 'u8[4096]{0}', space=vmem, size = 0x1000, scoped, tag = 'output window, operand 0, single buffered']
    %11 = vsyncpa [#allocation4], 0
    %12 = vsyncpa [#allocation7], 0
    %13 = vsyncpa [#allocation10], 0
    %14 = vsyncpa [#allocation5], 0
    // Predicated region
    $region2: #{tpu_custom_call.1} parent=1 // pred_check
      _
    $region3: #{tpu_custom_call.1} parent=1 // pred_check_branch
      %16 = sbr.rel (0) target = $region5
    $region4: #{tpu_custom_call.1} parent=1 // pred_region
      %s18 = ssub.s32 512, 512
      %19 = vsyncadd [#allocation4], %s18
      %s20 = sshll.u32 [#allocation3], 4
      %s21 = int_to_ptr.vmem [resolvable:$true] %s20
      %26 = dma.hbm_to_vmem [thread:$0]  %s0, 512, %s21, [#allocation4], 64, 64, 4
    $region5: #{tpu_custom_call.1} parent=1 // pred_fallthru
      _
    // Predicated region
    $region6: #{tpu_custom_call.1} parent=1 // pred_check
      _
    $region7: #{tpu_custom_call.1} parent=1 // pred_check_branch
      %28 = sbr.rel (0) target = $region9
    $region8: #{tpu_custom_call.1} parent=1 // pred_region
      %s30 = ssub.s32 1024, 1024
      %31 = vsyncadd [#allocation7], %s30
      %s32 = sshll.u32 [#allocation6], 4
      %s33 = int_to_ptr.vmem [resolvable:$true] %s32
      %38 = dma.hbm_to_vmem [thread:$0]  %s1, 1024, %s33, [#allocation7], 128, 128, 8
    $region9: #{tpu_custom_call.1} parent=1 // pred_fallthru
      _
    // Predicated region
    $region10: #{tpu_custom_call.1} parent=1 // pred_check
      _
    $region11: #{tpu_custom_call.1} parent=1 // pred_check_branch
      %40 = sbr.rel (0) target = $region13
    $region12: #{tpu_custom_call.1} parent=1 // pred_region
      %s42 = ssub.s32 1024, 1024
      %43 = vsyncadd [#allocation7], %s42
      %s44 = sshll.u32 [#allocation8], 4
      %s45 = int_to_ptr.vmem [resolvable:$true] %s44
      %50 = dma.hbm_to_vmem [thread:$0]  %s2, 1024, %s45, [#allocation7], 128, 128, 8
    $region13: #{tpu_custom_call.1} parent=1 // pred_fallthru
      _
    // Predicated region
    $region14: #{tpu_custom_call.1} parent=1 // pred_check
      _
    $region15: #{tpu_custom_call.1} parent=1 // pred_check_branch
      %52 = sbr.rel (0) target = $region17
    $region16: #{tpu_custom_call.1} parent=1 // pred_region
      _
    $region17: #{tpu_custom_call.1} parent=1 // pred_fallthru
      _
    // Predicated region
    $region18: #{tpu_custom_call.1} parent=1 // pred_check
      _
    $region19: #{tpu_custom_call.1} parent=1 // pred_check_branch
      %54 = sbr.rel (0) target = $region21
    $region20: #{tpu_custom_call.1} parent=1 // pred_region
      %s56 = ssub.s32 512, 512
      %57 = vsyncadd [#allocation10], %s56
      %s58 = sshll.u32 [#allocation9], 4
      %s59 = int_to_ptr.vmem [resolvable:$true] %s58
      %64 = dma.hbm_to_vmem [thread:$0]  %s4, 512, %s59, [#allocation10], 64, 64, 4
    $region21: #{tpu_custom_call.1} parent=1 // pred_fallthru
      _
    // Predicated region
    $region22: #{tpu_custom_call.1} parent=1 // pred_check
      _
    $region23: #{tpu_custom_call.1} parent=1 // pred_check_branch
      %66 = sbr.rel (0) target = $region25
    $region24: #{tpu_custom_call.1} parent=1 // pred_region
      _
    $region25: #{tpu_custom_call.1} parent=1 // pred_fallthru
      _
    // Predicated region
    $region26: #{tpu_custom_call.1} parent=1 // pred_check
      _
    $region27: #{tpu_custom_call.1} parent=1 // pred_check_branch
      %68 = sbr.rel (0) target = $region29
    $region28: #{tpu_custom_call.1} parent=1 // pred_region
      %69 = dma.done [#allocation4], 512
    $region29: #{tpu_custom_call.1} parent=1 // pred_fallthru
      _
    // Predicated region
    $region30: #{tpu_custom_call.1} parent=1 // pred_check
      _
    $region31: #{tpu_custom_call.1} parent=1 // pred_check_branch
      %71 = sbr.rel (0) target = $region33
    $region32: #{tpu_custom_call.1} parent=1 // pred_region
      %72 = dma.done [#allocation7], 1024
    $region33: #{tpu_custom_call.1} parent=1 // pred_fallthru
      _
    // Predicated region
    $region34: #{tpu_custom_call.1} parent=1 // pred_check
      _
    $region35: #{tpu_custom_call.1} parent=1 // pred_check_branch
      %74 = sbr.rel (0) target = $region37
    $region36: #{tpu_custom_call.1} parent=1 // pred_region
      %75 = dma.done [#allocation7], 1024
    $region37: #{tpu_custom_call.1} parent=1 // pred_fallthru
      _
    // Predicated region
    $region38: #{tpu_custom_call.1} parent=1 // pred_check
      _
    $region39: #{tpu_custom_call.1} parent=1 // pred_check_branch
      %77 = sbr.rel (0) target = $region41
    $region40: #{tpu_custom_call.1} parent=1 // pred_region
      %78 = dma.done [#allocation10], 512
    $region41: #{tpu_custom_call.1} parent=1 // pred_fallthru
      _
    %v80 = vld [vmem:[#allocation6] sm:$0xff]
    %v81 = vld [vmem:[#allocation6 + $0x8] sm:$0xff]
    %v82 = vld [vmem:[#allocation6 + $0x10] sm:$0xff]
    %v83 = vld [vmem:[#allocation6 + $0x18] sm:$0xff]
    %v84 = vld [vmem:[#allocation6 + $0x20] sm:$0xff]
    %v85 = vld [vmem:[#allocation6 + $0x28] sm:$0xff]
    %v86 = vld [vmem:[#allocation6 + $0x30] sm:$0xff]
    %v87 = vld [vmem:[#allocation6 + $0x38] sm:$0xff]
    %v88 = vld [vmem:[#allocation8] sm:$0xff]
    %v89 = vld [vmem:[#allocation8 + $0x8] sm:$0xff]
    %v90 = vld [vmem:[#allocation8 + $0x10] sm:$0xff]
    %v91 = vld [vmem:[#allocation8 + $0x18] sm:$0xff]
    %v92 = vld [vmem:[#allocation8 + $0x20] sm:$0xff]
    %v93 = vld [vmem:[#allocation8 + $0x28] sm:$0xff]
    %v94 = vld [vmem:[#allocation8 + $0x30] sm:$0xff]
    %v95 = vld [vmem:[#allocation8 + $0x38] sm:$0xff]
    %v96 = vld [vmem:[%s3] sm:$0x3]
    %v97 = vld [vmem:[#allocation3] sm:$0xf]
    %v99 = vlaneseq
    %v100 = vshrl.u32 %v99, 7
    %v101 = vsub.s32 0, %v100
    %v102 = vrot.slane %v96, %v101
    %v103 = vlaneseq
    %v104 = vshrl.u32 %v103, 7
    %v105 = vsub.s32 1, %v104
    %v106 = vrot.slane %v96, %v105
    %v117 = vunpack.c.l.b16 %v80
    %v118 = vunpack.c.h.b16 %v80
    %v119 = vunpack.c.l.b16 %v81
    %v120 = vunpack.c.h.b16 %v81
    %v121 = vunpack.c.l.b16 %v82
    %v122 = vunpack.c.h.b16 %v82
    %v123 = vunpack.c.l.b16 %v83
    %v124 = vunpack.c.h.b16 %v83
    %v125 = vunpack.c.l.b16 %v84
    %v126 = vunpack.c.h.b16 %v84
    %v127 = vunpack.c.l.b16 %v85
    %v128 = vunpack.c.h.b16 %v85
    %v129 = vunpack.c.l.b16 %v86
    %v130 = vunpack.c.h.b16 %v86
    %v131 = vunpack.c.l.b16 %v87
    %v132 = vunpack.c.h.b16 %v87
    %v133 = vpack.c.b16 %v119, %v117
    %v134 = vpack.c.b16 %v120, %v118
    %v135 = vpack.c.b16 %v123, %v121
    %v136 = vpack.c.b16 %v124, %v122
    %v137 = vpack.c.b16 %v127, %v125
    %v138 = vpack.c.b16 %v128, %v126
    %v139 = vpack.c.b16 %v131, %v129
    %v140 = vpack.c.b16 %v132, %v130
    %vm149 = vcmask 523264
    %v151 = vsel %vm149, %v97, 0
    %153 = vmatprep.subr.bf16.mxu0 %v134
    %154 = vmatpush1.bf16.msra.mxu0 %v133
    %155 = vmatprep.subr.bf16.mxu0 %v136
    %156 = vmatpush1.bf16.msra.mxu0 %v135
    %157 = vmatprep.subr.bf16.mxu0 %v138
    %158 = vmatpush1.bf16.msra.mxu0 %v137
    %159 = vmatprep.subr.bf16.mxu0 %v140
    %160 = vmatpush1.bf16.msra.mxu0 %v139
    %161 = vmatprep.subr.bf16.mxu0 0
    %162 = vmatpush1.bf16.msra.mxu0 0
    %163 = vmatprep.subr.bf16.mxu0 0
    %164 = vmatpush1.bf16.msra.mxu0 0
    %165 = vmatprep.subr.bf16.mxu0 0
    %166 = vmatpush1.bf16.msra.mxu0 0
    %167 = vmatprep.subr.bf16.mxu0 0
    %168 = vmatpush1.bf16.msra.mxu0 0
    %169 = vmatprep.subr.bf16.mxu0 0
    %170 = vmatpush1.bf16.msra.mxu0 0
    %171 = vmatprep.subr.bf16.mxu0 0
    %172 = vmatpush1.bf16.msra.mxu0 0
    %173 = vmatprep.subr.bf16.mxu0 0
    %174 = vmatpush1.bf16.msra.mxu0 0
    %175 = vmatprep.subr.bf16.mxu0 0
    %176 = vmatpush1.bf16.msra.mxu0 0
    %177 = vmatprep.subr.bf16.mxu0 0
    %178 = vmatpush1.bf16.msra.mxu0 0
    %179 = vmatprep.subr.bf16.mxu0 0
    %180 = vmatpush1.bf16.msra.mxu0 0
    %181 = vmatprep.subr.bf16.mxu0 0
    %182 = vmatpush1.bf16.msra.mxu0 0
    %183 = vmatprep.subr.bf16.mxu0 0
    %184 = vmatpush1.bf16.msra.mxu0 0
    %185 = vmatprep.mubr.bf16.mxu0 0
    %186 = vmatmul.mubr.bf16.gmra.mrb[0].mxu0 %v151
    %v187 = vpop.f32.mrb[0].mxu0
    %v188 = vadd.f32 %v102, %v187
    %v189 = vpop.f32.mrb[0].mxu0
    %v190 = vadd.f32 %v106, %v189
    %v191 = vpop.f32.mrb[0].mxu0
    %v192 = vpop.f32.mrb[0].mxu0
    %193 = vdwg.mxu0
    %194 = vst [vmem:[#allocation2] sm:$0xff] %v188
    %195 = vst [vmem:[#allocation2 + $0x8] sm:$0xff] %v190
    %s196 = scalar_lea.vmem [#allocation3], 4
    %v197 = vld [vmem:[%s196] sm:$0xf]
    %v199 = vsel %vm149, %v197, 0
    %201 = vmatprep.subr.bf16.mxu0 %v134
    %202 = vmatpush1.bf16.msra.mxu0 %v133
    %203 = vmatprep.subr.bf16.mxu0 %v136
    %204 = vmatpush1.bf16.msra.mxu0 %v135
    %205 = vmatprep.subr.bf16.mxu0 %v138
    %206 = vmatpush1.bf16.msra.mxu0 %v137
    %207 = vmatprep.subr.bf16.mxu0 %v140
    %208 = vmatpush1.bf16.msra.mxu0 %v139
    %209 = vmatprep.subr.bf16.mxu0 0
    %210 = vmatpush1.bf16.msra.mxu0 0
    %211 = vmatprep.subr.bf16.mxu0 0
    %212 = vmatpush1.bf16.msra.mxu0 0
    %213 = vmatprep.subr.bf16.mxu0 0
    %214 = vmatpush1.bf16.msra.mxu0 0
    %215 = vmatprep.subr.bf16.mxu0 0
    %216 = vmatpush1.bf16.msra.mxu0 0
    %217 = vmatprep.subr.bf16.mxu0 0
    %218 = vmatpush1.bf16.msra.mxu0 0
    %219 = vmatprep.subr.bf16.mxu0 0
    %220 = vmatpush1.bf16.msra.mxu0 0
    %221 = vmatprep.subr.bf16.mxu0 0
    %222 = vmatpush1.bf16.msra.mxu0 0
    %223 = vmatprep.subr.bf16.mxu0 0
    %224 = vmatpush1.bf16.msra.mxu0 0
    %225 = vmatprep.subr.bf16.mxu0 0
    %226 = vmatpush1.bf16.msra.mxu0 0
    %227 = vmatprep.subr.bf16.mxu0 0
    %228 = vmatpush1.bf16.msra.mxu0 0
    %229 = vmatprep.subr.bf16.mxu0 0
    %230 = vmatpush1.bf16.msra.mxu0 0
    %231 = vmatprep.subr.bf16.mxu0 0
    %232 = vmatpush1.bf16.msra.mxu0 0
    %233 = vmatprep.mubr.bf16.mxu0 0
    %234 = vmatmul.mubr.bf16.gmra.mrb[0].mxu0 %v199
    %v235 = vpop.f32.mrb[0].mxu0
    %v236 = vadd.f32 %v102, %v235
    %v237 = vpop.f32.mrb[0].mxu0
    %v238 = vadd.f32 %v106, %v237
    %v239 = vpop.f32.mrb[0].mxu0
    %v240 = vpop.f32.mrb[0].mxu0
    %241 = vdwg.mxu0
    %s242 = scalar_lea.vmem [#allocation2], 16
    %243 = vst [vmem:[%s242] sm:$0xff] %v236
    %244 = vst [vmem:[%s242 + $0x8] sm:$0xff] %v238
    %s245 = scalar_lea.vmem [#allocation3], 8
    %v246 = vld [vmem:[%s245] sm:$0xf]
    %v248 = vsel %vm149, %v246, 0
    %250 = vmatprep.subr.bf16.mxu0 %v134
    %251 = vmatpush1.bf16.msra.mxu0 %v133
    %252 = vmatprep.subr.bf16.mxu0 %v136
    %253 = vmatpush1.bf16.msra.mxu0 %v135
    %254 = vmatprep.subr.bf16.mxu0 %v138
    %255 = vmatpush1.bf16.msra.mxu0 %v137
    %256 = vmatprep.subr.bf16.mxu0 %v140
    %257 = vmatpush1.bf16.msra.mxu0 %v139
    %258 = vmatprep.subr.bf16.mxu0 0
    %259 = vmatpush1.bf16.msra.mxu0 0
    %260 = vmatprep.subr.bf16.mxu0 0
    %261 = vmatpush1.bf16.msra.mxu0 0
    %262 = vmatprep.subr.bf16.mxu0 0
    %263 = vmatpush1.bf16.msra.mxu0 0
    %264 = vmatprep.subr.bf16.mxu0 0
    %265 = vmatpush1.bf16.msra.mxu0 0
    %266 = vmatprep.subr.bf16.mxu0 0
    %267 = vmatpush1.bf16.msra.mxu0 0
    %268 = vmatprep.subr.bf16.mxu0 0
    %269 = vmatpush1.bf16.msra.mxu0 0
    %270 = vmatprep.subr.bf16.mxu0 0
    %271 = vmatpush1.bf16.msra.mxu0 0
    %272 = vmatprep.subr.bf16.mxu0 0
    %273 = vmatpush1.bf16.msra.mxu0 0
    %274 = vmatprep.subr.bf16.mxu0 0
    %275 = vmatpush1.bf16.msra.mxu0 0
    %276 = vmatprep.subr.bf16.mxu0 0
    %277 = vmatpush1.bf16.msra.mxu0 0
    %278 = vmatprep.subr.bf16.mxu0 0
    %279 = vmatpush1.bf16.msra.mxu0 0
    %280 = vmatprep.subr.bf16.mxu0 0
    %281 = vmatpush1.bf16.msra.mxu0 0
    %282 = vmatprep.mubr.bf16.mxu0 0
    %283 = vmatmul.mubr.bf16.gmra.mrb[0].mxu0 %v248
    %v284 = vpop.f32.mrb[0].mxu0
    %v285 = vadd.f32 %v102, %v284
    %v286 = vpop.f32.mrb[0].mxu0
    %v287 = vadd.f32 %v106, %v286
    %v288 = vpop.f32.mrb[0].mxu0
    %v289 = vpop.f32.mrb[0].mxu0
    %290 = vdwg.mxu0
    %s291 = scalar_lea.vmem [#allocation2], 32
    %292 = vst [vmem:[%s291] sm:$0xff] %v285
    %293 = vst [vmem:[%s291 + $0x8] sm:$0xff] %v287
    %s294 = scalar_lea.vmem [#allocation3], 12
    %v295 = vld [vmem:[%s294] sm:$0xf]
    %v297 = vsel %vm149, %v295, 0
    %299 = vmatprep.subr.bf16.mxu0 %v134
    %300 = vmatpush1.bf16.msra.mxu0 %v133
    %301 = vmatprep.subr.bf16.mxu0 %v136
    %302 = vmatpush1.bf16.msra.mxu0 %v135
    %303 = vmatprep.subr.bf16.mxu0 %v138
    %304 = vmatpush1.bf16.msra.mxu0 %v137
    %305 = vmatprep.subr.bf16.mxu0 %v140
    %306 = vmatpush1.bf16.msra.mxu0 %v139
    %307 = vmatprep.subr.bf16.mxu0 0
    %308 = vmatpush1.bf16.msra.mxu0 0
    %309 = vmatprep.subr.bf16.mxu0 0
    %310 = vmatpush1.bf16.msra.mxu0 0
    %311 = vmatprep.subr.bf16.mxu0 0
    %312 = vmatpush1.bf16.msra.mxu0 0
    %313 = vmatprep.subr.bf16.mxu0 0
    %314 = vmatpush1.bf16.msra.mxu0 0
    %315 = vmatprep.subr.bf16.mxu0 0
    %316 = vmatpush1.bf16.msra.mxu0 0
    %317 = vmatprep.subr.bf16.mxu0 0
    %318 = vmatpush1.bf16.msra.mxu0 0
    %319 = vmatprep.subr.bf16.mxu0 0
    %320 = vmatpush1.bf16.msra.mxu0 0
    %321 = vmatprep.subr.bf16.mxu0 0
    %322 = vmatpush1.bf16.msra.mxu0 0
    %323 = vmatprep.subr.bf16.mxu0 0
    %324 = vmatpush1.bf16.msra.mxu0 0
    %325 = vmatprep.subr.bf16.mxu0 0
    %326 = vmatpush1.bf16.msra.mxu0 0
    %327 = vmatprep.subr.bf16.mxu0 0
    %328 = vmatpush1.bf16.msra.mxu0 0
    %329 = vmatprep.subr.bf16.mxu0 0
    %330 = vmatpush1.bf16.msra.mxu0 0
    %331 = vmatprep.mubr.bf16.mxu0 0
    %332 = vmatmul.mubr.bf16.gmra.mrb[0].mxu0 %v297
    %v333 = vpop.f32.mrb[0].mxu0
    %v334 = vadd.f32 %v102, %v333
    %v335 = vpop.f32.mrb[0].mxu0
    %v336 = vadd.f32 %v106, %v335
    %v337 = vpop.f32.mrb[0].mxu0
    %v338 = vpop.f32.mrb[0].mxu0
    %339 = vdwg.mxu0
    %s340 = scalar_lea.vmem [#allocation2], 48
    %341 = vst [vmem:[%s340] sm:$0xff] %v334
    %342 = vst [vmem:[%s340 + $0x8] sm:$0xff] %v336
    %s343 = scalar_lea.vmem [#allocation3], 16
    %v344 = vld [vmem:[%s343] sm:$0xf]
    %v346 = vsel %vm149, %v344, 0
    %348 = vmatprep.subr.bf16.mxu0 %v134
    %349 = vmatpush1.bf16.msra.mxu0 %v133
    %350 = vmatprep.subr.bf16.mxu0 %v136
    %351 = vmatpush1.bf16.msra.mxu0 %v135
    %352 = vmatprep.subr.bf16.mxu0 %v138
    %353 = vmatpush1.bf16.msra.mxu0 %v137
    %354 = vmatprep.subr.bf16.mxu0 %v140
    %355 = vmatpush1.bf16.msra.mxu0 %v139
    %356 = vmatprep.subr.bf16.mxu0 0
    %357 = vmatpush1.bf16.msra.mxu0 0
    %358 = vmatprep.subr.bf16.mxu0 0
    %359 = vmatpush1.bf16.msra.mxu0 0
    %360 = vmatprep.subr.bf16.mxu0 0
    %361 = vmatpush1.bf16.msra.mxu0 0
    %362 = vmatprep.subr.bf16.mxu0 0
    %363 = vmatpush1.bf16.msra.mxu0 0
    %364 = vmatprep.subr.bf16.mxu0 0
    %365 = vmatpush1.bf16.msra.mxu0 0
    %366 = vmatprep.subr.bf16.mxu0 0
    %367 = vmatpush1.bf16.msra.mxu0 0
    %368 = vmatprep.subr.bf16.mxu0 0
    %369 = vmatpush1.bf16.msra.mxu0 0
    %370 = vmatprep.subr.bf16.mxu0 0
    %371 = vmatpush1.bf16.msra.mxu0 0
    %372 = vmatprep.subr.bf16.mxu0 0
    %373 = vmatpush1.bf16.msra.mxu0 0
    %374 = vmatprep.subr.bf16.mxu0 0
    %375 = vmatpush1.bf16.msra.mxu0 0
    %376 = vmatprep.subr.bf16.mxu0 0
    %377 = vmatpush1.bf16.msra.mxu0 0
    %378 = vmatprep.subr.bf16.mxu0 0
    %379 = vmatpush1.bf16.msra.mxu0 0
    %380 = vmatprep.mubr.bf16.mxu0 0
    %381 = vmatmul.mubr.bf16.gmra.mrb[0].mxu0 %v346
    %v382 = vpop.f32.mrb[0].mxu0
    %v383 = vadd.f32 %v102, %v382
    %v384 = vpop.f32.mrb[0].mxu0
    %v385 = vadd.f32 %v106, %v384
    %v386 = vpop.f32.mrb[0].mxu0
    %v387 = vpop.f32.mrb[0].mxu0
    %388 = vdwg.mxu0
    %s389 = scalar_lea.vmem [#allocation2], 64
    %390 = vst [vmem:[%s389] sm:$0xff] %v383
    %391 = vst [vmem:[%s389 + $0x8] sm:$0xff] %v385
    %s392 = scalar_lea.vmem [#allocation3], 20
    %v393 = vld [vmem:[%s392] sm:$0xf]
    %v395 = vsel %vm149, %v393, 0
    %397 = vmatprep.subr.bf16.mxu0 %v134
    %398 = vmatpush1.bf16.msra.mxu0 %v133
    %399 = vmatprep.subr.bf16.mxu0 %v136
    %400 = vmatpush1.bf16.msra.mxu0 %v135
    %401 = vmatprep.subr.bf16.mxu0 %v138
    %402 = vmatpush1.bf16.msra.mxu0 %v137
    %403 = vmatprep.subr.bf16.mxu0 %v140
    %404 = vmatpush1.bf16.msra.mxu0 %v139
    %405 = vmatprep.subr.bf16.mxu0 0
    %406 = vmatpush1.bf16.msra.mxu0 0
    %407 = vmatprep.subr.bf16.mxu0 0
    %408 = vmatpush1.bf16.msra.mxu0 0
    %409 = vmatprep.subr.bf16.mxu0 0
    %410 = vmatpush1.bf16.msra.mxu0 0
    %411 = vmatprep.subr.bf16.mxu0 0
    %412 = vmatpush1.bf16.msra.mxu0 0
    %413 = vmatprep.subr.bf16.mxu0 0
    %414 = vmatpush1.bf16.msra.mxu0 0
    %415 = vmatprep.subr.bf16.mxu0 0
    %416 = vmatpush1.bf16.msra.mxu0 0
    %417 = vmatprep.subr.bf16.mxu0 0
    %418 = vmatpush1.bf16.msra.mxu0 0
    %419 = vmatprep.subr.bf16.mxu0 0
    %420 = vmatpush1.bf16.msra.mxu0 0
    %421 = vmatprep.subr.bf16.mxu0 0
    %422 = vmatpush1.bf16.msra.mxu0 0
    %423 = vmatprep.subr.bf16.mxu0 0
    %424 = vmatpush1.bf16.msra.mxu0 0
    %425 = vmatprep.subr.bf16.mxu0 0
    %426 = vmatpush1.bf16.msra.mxu0 0
    %427 = vmatprep.subr.bf16.mxu0 0
    %428 = vmatpush1.bf16.msra.mxu0 0
    %429 = vmatprep.mubr.bf16.mxu0 0
    %430 = vmatmul.mubr.bf16.gmra.mrb[0].mxu0 %v395
    %v431 = vpop.f32.mrb[0].mxu0
    %v432 = vadd.f32 %v102, %v431
    %v433 = vpop.f32.mrb[0].mxu0
    %v434 = vadd.f32 %v106, %v433
    %v435 = vpop.f32.mrb[0].mxu0
    %v436 = vpop.f32.mrb[0].mxu0
    %437 = vdwg.mxu0
    %s438 = scalar_lea.vmem [#allocation2], 80
    %439 = vst [vmem:[%s438] sm:$0xff] %v432
    %440 = vst [vmem:[%s438 + $0x8] sm:$0xff] %v434
    %s441 = scalar_lea.vmem [#allocation3], 24
    %v442 = vld [vmem:[%s441] sm:$0xf]
    %v444 = vsel %vm149, %v442, 0
    %446 = vmatprep.subr.bf16.mxu0 %v134
    %447 = vmatpush1.bf16.msra.mxu0 %v133
    %448 = vmatprep.subr.bf16.mxu0 %v136
    %449 = vmatpush1.bf16.msra.mxu0 %v135
    %450 = vmatprep.subr.bf16.mxu0 %v138
    %451 = vmatpush1.bf16.msra.mxu0 %v137
    %452 = vmatprep.subr.bf16.mxu0 %v140
    %453 = vmatpush1.bf16.msra.mxu0 %v139
    %454 = vmatprep.subr.bf16.mxu0 0
    %455 = vmatpush1.bf16.msra.mxu0 0
    %456 = vmatprep.subr.bf16.mxu0 0
    %457 = vmatpush1.bf16.msra.mxu0 0
    %458 = vmatprep.subr.bf16.mxu0 0
    %459 = vmatpush1.bf16.msra.mxu0 0
    %460 = vmatprep.subr.bf16.mxu0 0
    %461 = vmatpush1.bf16.msra.mxu0 0
    %462 = vmatprep.subr.bf16.mxu0 0
    %463 = vmatpush1.bf16.msra.mxu0 0
    %464 = vmatprep.subr.bf16.mxu0 0
    %465 = vmatpush1.bf16.msra.mxu0 0
    %466 = vmatprep.subr.bf16.mxu0 0
    %467 = vmatpush1.bf16.msra.mxu0 0
    %468 = vmatprep.subr.bf16.mxu0 0
    %469 = vmatpush1.bf16.msra.mxu0 0
    %470 = vmatprep.subr.bf16.mxu0 0
    %471 = vmatpush1.bf16.msra.mxu0 0
    %472 = vmatprep.subr.bf16.mxu0 0
    %473 = vmatpush1.bf16.msra.mxu0 0
    %474 = vmatprep.subr.bf16.mxu0 0
    %475 = vmatpush1.bf16.msra.mxu0 0
    %476 = vmatprep.subr.bf16.mxu0 0
    %477 = vmatpush1.bf16.msra.mxu0 0
    %478 = vmatprep.mubr.bf16.mxu0 0
    %479 = vmatmul.mubr.bf16.gmra.mrb[0].mxu0 %v444
    %v480 = vpop.f32.mrb[0].mxu0
    %v481 = vadd.f32 %v102, %v480
    %v482 = vpop.f32.mrb[0].mxu0
    %v483 = vadd.f32 %v106, %v482
    %v484 = vpop.f32.mrb[0].mxu0
    %v485 = vpop.f32.mrb[0].mxu0
    %486 = vdwg.mxu0
    %s487 = scalar_lea.vmem [#allocation2], 96
    %488 = vst [vmem:[%s487] sm:$0xff] %v481
    %489 = vst [vmem:[%s487 + $0x8] sm:$0xff] %v483
    %s490 = scalar_lea.vmem [#allocation3], 28
    %v491 = vld [vmem:[%s490] sm:$0xf]
    %v493 = vsel %vm149, %v491, 0
    %495 = vmatprep.subr.bf16.mxu0 %v134
    %496 = vmatpush1.bf16.msra.mxu0 %v133
    %497 = vmatprep.subr.bf16.mxu0 %v136
    %498 = vmatpush1.bf16.msra.mxu0 %v135
    %499 = vmatprep.subr.bf16.mxu0 %v138
    %500 = vmatpush1.bf16.msra.mxu0 %v137
    %501 = vmatprep.subr.bf16.mxu0 %v140
    %502 = vmatpush1.bf16.msra.mxu0 %v139
    %503 = vmatprep.subr.bf16.mxu0 0
    %504 = vmatpush1.bf16.msra.mxu0 0
    %505 = vmatprep.subr.bf16.mxu0 0
    %506 = vmatpush1.bf16.msra.mxu0 0
    %507 = vmatprep.subr.bf16.mxu0 0
    %508 = vmatpush1.bf16.msra.mxu0 0
    %509 = vmatprep.subr.bf16.mxu0 0
    %510 = vmatpush1.bf16.msra.mxu0 0
    %511 = vmatprep.subr.bf16.mxu0 0
    %512 = vmatpush1.bf16.msra.mxu0 0
    %513 = vmatprep.subr.bf16.mxu0 0
    %514 = vmatpush1.bf16.msra.mxu0 0
    %515 = vmatprep.subr.bf16.mxu0 0
    %516 = vmatpush1.bf16.msra.mxu0 0
    %517 = vmatprep.subr.bf16.mxu0 0
    %518 = vmatpush1.bf16.msra.mxu0 0
    %519 = vmatprep.subr.bf16.mxu0 0
    %520 = vmatpush1.bf16.msra.mxu0 0
    %521 = vmatprep.subr.bf16.mxu0 0
    %522 = vmatpush1.bf16.msra.mxu0 0
    %523 = vmatprep.subr.bf16.mxu0 0
    %524 = vmatpush1.bf16.msra.mxu0 0
    %525 = vmatprep.subr.bf16.mxu0 0
    %526 = vmatpush1.bf16.msra.mxu0 0
    %527 = vmatprep.mubr.bf16.mxu0 0
    %528 = vmatmul.mubr.bf16.gmra.mrb[0].mxu0 %v493
    %v529 = vpop.f32.mrb[0].mxu0
    %v530 = vadd.f32 %v102, %v529
    %v531 = vpop.f32.mrb[0].mxu0
    %v532 = vadd.f32 %v106, %v531
    %v533 = vpop.f32.mrb[0].mxu0
    %v534 = vpop.f32.mrb[0].mxu0
    %535 = vdwg.mxu0
    %s536 = scalar_lea.vmem [#allocation2], 112
    %537 = vst [vmem:[%s536] sm:$0xff] %v530
    %538 = vst [vmem:[%s536 + $0x8] sm:$0xff] %v532
    %v539 = vld [vmem:[#allocation2] sm:$0xff]
    %v540 = vld [vmem:[#allocation2 + $0x8] sm:$0xff]
    %v549 = vunpack.c.l.b16 %v88
    %v550 = vunpack.c.h.b16 %v88
    %v551 = vunpack.c.l.b16 %v89
    %v552 = vunpack.c.h.b16 %v89
    %v553 = vunpack.c.l.b16 %v90
    %v554 = vunpack.c.h.b16 %v90
    %v555 = vunpack.c.l.b16 %v91
    %v556 = vunpack.c.h.b16 %v91
    %v557 = vunpack.c.l.b16 %v92
    %v558 = vunpack.c.h.b16 %v92
    %v559 = vunpack.c.l.b16 %v93
    %v560 = vunpack.c.h.b16 %v93
    %v561 = vunpack.c.l.b16 %v94
    %v562 = vunpack.c.h.b16 %v94
    %v563 = vunpack.c.l.b16 %v95
    %v564 = vunpack.c.h.b16 %v95
    %v565 = vpack.c.b16 %v551, %v549
    %v566 = vpack.c.b16 %v552, %v550
    %v567 = vpack.c.b16 %v555, %v553
    %v568 = vpack.c.b16 %v556, %v554
    %v569 = vpack.c.b16 %v559, %v557
    %v570 = vpack.c.b16 %v560, %v558
    %v571 = vpack.c.b16 %v563, %v561
    %v572 = vpack.c.b16 %v564, %v562
    %v582 = vsel %vm149, 0, 0
    %584 = vmatprep.subr.bf16.mxu0 %v566
    %585 = vmatpush1.bf16.msra.mxu0 %v565
    %586 = vmatprep.subr.bf16.mxu0 %v568
    %587 = vmatpush1.bf16.msra.mxu0 %v567
    %588 = vmatprep.subr.bf16.mxu0 %v570
    %589 = vmatpush1.bf16.msra.mxu0 %v569
    %590 = vmatprep.subr.bf16.mxu0 %v572
    %591 = vmatpush1.bf16.msra.mxu0 %v571
    %592 = vmatprep.subr.bf16.mxu0 0
    %593 = vmatpush1.bf16.msra.mxu0 0
    %594 = vmatprep.subr.bf16.mxu0 0
    %595 = vmatpush1.bf16.msra.mxu0 0
    %596 = vmatprep.subr.bf16.mxu0 0
    %597 = vmatpush1.bf16.msra.mxu0 0
    %598 = vmatprep.subr.bf16.mxu0 0
    %599 = vmatpush1.bf16.msra.mxu0 0
    %600 = vmatprep.subr.bf16.mxu0 0
    %601 = vmatpush1.bf16.msra.mxu0 0
    %602 = vmatprep.subr.bf16.mxu0 0
    %603 = vmatpush1.bf16.msra.mxu0 0
    %604 = vmatprep.subr.bf16.mxu0 0
    %605 = vmatpush1.bf16.msra.mxu0 0
    %606 = vmatprep.subr.bf16.mxu0 0
    %607 = vmatpush1.bf16.msra.mxu0 0
    %608 = vmatprep.subr.bf16.mxu0 0
    %609 = vmatpush1.bf16.msra.mxu0 0
    %610 = vmatprep.subr.bf16.mxu0 0
    %611 = vmatpush1.bf16.msra.mxu0 0
    %612 = vmatprep.subr.bf16.mxu0 0
    %613 = vmatpush1.bf16.msra.mxu0 0
    %614 = vmatprep.subr.bf16.mxu0 0
    %615 = vmatpush1.bf16.msra.mxu0 0
    %616 = vmatprep.mubr.bf16.mxu0 0
    %617 = vmatmul.mubr.bf16.gmra.mrb[0].mxu0 %v582
    %v618 = vpop.f32.mrb[0].mxu0
    %v619 = vadd.f32 0.0, %v618
    %v620 = vpop.f32.mrb[0].mxu0
    %v621 = vadd.f32 0.0, %v620
    %v622 = vpop.f32.mrb[0].mxu0
    %v623 = vpop.f32.mrb[0].mxu0
    %624 = vdwg.mxu0
    %v625 = vadd.f32 %v539, %v619
    %v626 = vadd.f32 %v540, %v621
    %v627 = vxor.u32 %v625, 2147483648
    %v628 = vxor.u32 %v626, 2147483648
    %v629 = vmul.f32 %v627, 1.442695
    %v630 = vpow.pop %v629
    %v631 = vmul.f32 %v628, 1.442695
    %v632 = vpow.pop %v631
    %v633 = vadd.f32 %v630, 1.0
    %v634 = vadd.f32 %v632, 1.0
    %v635 = vrcp.pop %v633
    %v636 = vmul.f32 1.0, %v635
    %v637 = vrcp.pop %v634
    %v638 = vmul.f32 1.0, %v637
    %v639 = vtanh.pop %v626
    %v640 = vmul.f32 %v636, 0.0
    %642 = vrot.lane.b32.xlu0 %v639, 64
    %v643 = vpop.permute.xlu0 %642
    %v645 = vmul.f32 %v636, %v643
    %647 = vrot.lane.b32.xlu0 %v645, 64
    %v648 = vpop.permute.xlu0 %647
    %v650 = vadd.f32 %v640, %v648
    %v651 = vtanh.pop %v650
    %653 = vrot.lane.b32.xlu0 %v651, 64
    %v654 = vpop.permute.xlu0 %653
    %v656 = vmul.f32 %v638, %v654
    %v657 = vld [vmem:[%s242] sm:$0xff]
    %v658 = vld [vmem:[%s242 + $0x8] sm:$0xff]
    %v659 = vpack.c.bf16 %v656, %v656
    %v661 = vsel %vm149, %v659, 0
    %663 = vmatprep.subr.bf16.mxu0 %v566
    %664 = vmatpush1.bf16.msra.mxu0 %v565
    %665 = vmatprep.subr.bf16.mxu0 %v568
    %666 = vmatpush1.bf16.msra.mxu0 %v567
    %667 = vmatprep.subr.bf16.mxu0 %v570
    %668 = vmatpush1.bf16.msra.mxu0 %v569
    %669 = vmatprep.subr.bf16.mxu0 %v572
    %670 = vmatpush1.bf16.msra.mxu0 %v571
    %671 = vmatprep.subr.bf16.mxu0 0
    %672 = vmatpush1.bf16.msra.mxu0 0
    %673 = vmatprep.subr.bf16.mxu0 0
    %674 = vmatpush1.bf16.msra.mxu0 0
    %675 = vmatprep.subr.bf16.mxu0 0
    %676 = vmatpush1.bf16.msra.mxu0 0
    %677 = vmatprep.subr.bf16.mxu0 0
    %678 = vmatpush1.bf16.msra.mxu0 0
    %679 = vmatprep.subr.bf16.mxu0 0
    %680 = vmatpush1.bf16.msra.mxu0 0
    %681 = vmatprep.subr.bf16.mxu0 0
    %682 = vmatpush1.bf16.msra.mxu0 0
    %683 = vmatprep.subr.bf16.mxu0 0
    %684 = vmatpush1.bf16.msra.mxu0 0
    %685 = vmatprep.subr.bf16.mxu0 0
    %686 = vmatpush1.bf16.msra.mxu0 0
    %687 = vmatprep.subr.bf16.mxu0 0
    %688 = vmatpush1.bf16.msra.mxu0 0
    %689 = vmatprep.subr.bf16.mxu0 0
    %690 = vmatpush1.bf16.msra.mxu0 0
    %691 = vmatprep.subr.bf16.mxu0 0
    %692 = vmatpush1.bf16.msra.mxu0 0
    %693 = vmatprep.subr.bf16.mxu0 0
    %694 = vmatpush1.bf16.msra.mxu0 0
    %695 = vmatprep.mubr.bf16.mxu0 0
    %696 = vmatmul.mubr.bf16.gmra.mrb[0].mxu0 %v661
    %v697 = vpop.f32.mrb[0].mxu0
    %v698 = vadd.f32 0.0, %v697
    %v699 = vpop.f32.mrb[0].mxu0
    %v700 = vadd.f32 0.0, %v699
    %v701 = vpop.f32.mrb[0].mxu0
    %v702 = vpop.f32.mrb[0].mxu0
    %703 = vdwg.mxu0
    %v704 = vadd.f32 %v657, %v698
    %v705 = vadd.f32 %v658, %v700
    %v706 = vxor.u32 %v704, 2147483648
    %v707 = vxor.u32 %v705, 2147483648
    %v708 = vmul.f32 %v706, 1.442695
    %v709 = vpow.pop %v708
    %v710 = vmul.f32 %v707, 1.442695
    %v711 = vpow.pop %v710
    %v712 = vadd.f32 %v709, 1.0
    %v713 = vadd.f32 %v711, 1.0
    %v714 = vrcp.pop %v712
    %v715 = vmul.f32 1.0, %v714
    %v716 = vrcp.pop %v713
    %v717 = vmul.f32 1.0, %v716
    %v718 = vtanh.pop %v705
    %v719 = vmul.f32 %v715, %v650
    %721 = vrot.lane.b32.xlu0 %v718, 64
    %v722 = vpop.permute.xlu0 %721
    %v724 = vmul.f32 %v715, %v722
    %726 = vrot.lane.b32.xlu0 %v724, 64
    %v727 = vpop.permute.xlu0 %726
    %v729 = vadd.f32 %v719, %v727
    %v730 = vtanh.pop %v729
    %732 = vrot.lane.b32.xlu0 %v730, 64
    %v733 = vpop.permute.xlu0 %732
    %v735 = vmul.f32 %v717, %v733
    %v736 = vld [vmem:[%s291] sm:$0xff]
    %v737 = vld [vmem:[%s291 + $0x8] sm:$0xff]
    %v738 = vpack.c.bf16 %v735, %v735
    %v740 = vsel %vm149, %v738, 0
    %742 = vmatprep.subr.bf16.mxu0 %v566
    %743 = vmatpush1.bf16.msra.mxu0 %v565
    %744 = vmatprep.subr.bf16.mxu0 %v568
    %745 = vmatpush1.bf16.msra.mxu0 %v567
    %746 = vmatprep.subr.bf16.mxu0 %v570
    %747 = vmatpush1.bf16.msra.mxu0 %v569
    %748 = vmatprep.subr.bf16.mxu0 %v572
    %749 = vmatpush1.bf16.msra.mxu0 %v571
    %750 = vmatprep.subr.bf16.mxu0 0
    %751 = vmatpush1.bf16.msra.mxu0 0
    %752 = vmatprep.subr.bf16.mxu0 0
    %753 = vmatpush1.bf16.msra.mxu0 0
    %754 = vmatprep.subr.bf16.mxu0 0
    %755 = vmatpush1.bf16.msra.mxu0 0
    %756 = vmatprep.subr.bf16.mxu0 0
    %757 = vmatpush1.bf16.msra.mxu0 0
    %758 = vmatprep.subr.bf16.mxu0 0
    %759 = vmatpush1.bf16.msra.mxu0 0
    %760 = vmatprep.subr.bf16.mxu0 0
    %761 = vmatpush1.bf16.msra.mxu0 0
    %762 = vmatprep.subr.bf16.mxu0 0
    %763 = vmatpush1.bf16.msra.mxu0 0
    %764 = vmatprep.subr.bf16.mxu0 0
    %765 = vmatpush1.bf16.msra.mxu0 0
    %766 = vmatprep.subr.bf16.mxu0 0
    %767 = vmatpush1.bf16.msra.mxu0 0
    %768 = vmatprep.subr.bf16.mxu0 0
    %769 = vmatpush1.bf16.msra.mxu0 0
    %770 = vmatprep.subr.bf16.mxu0 0
    %771 = vmatpush1.bf16.msra.mxu0 0
    %772 = vmatprep.subr.bf16.mxu0 0
    %773 = vmatpush1.bf16.msra.mxu0 0
    %774 = vmatprep.mubr.bf16.mxu0 0
    %775 = vmatmul.mubr.bf16.gmra.mrb[0].mxu0 %v740
    %v776 = vpop.f32.mrb[0].mxu0
    %v777 = vadd.f32 0.0, %v776
    %v778 = vpop.f32.mrb[0].mxu0
    %v779 = vadd.f32 0.0, %v778
    %v780 = vpop.f32.mrb[0].mxu0
    %v781 = vpop.f32.mrb[0].mxu0
    %782 = vdwg.mxu0
    %v783 = vadd.f32 %v736, %v777
    %v784 = vadd.f32 %v737, %v779
    %v785 = vxor.u32 %v783, 2147483648
    %v786 = vxor.u32 %v784, 2147483648
    %v787 = vmul.f32 %v785, 1.442695
    %v788 = vpow.pop %v787
    %v789 = vmul.f32 %v786, 1.442695
    %v790 = vpow.pop %v789
    %v791 = vadd.f32 %v788, 1.0
    %v792 = vadd.f32 %v790, 1.0
    %v793 = vrcp.pop %v791
    %v794 = vmul.f32 1.0, %v793
    %v795 = vrcp.pop %v792
    %v796 = vmul.f32 1.0, %v795
    %v797 = vtanh.pop %v784
    %v798 = vmul.f32 %v794, %v729
    %800 = vrot.lane.b32.xlu0 %v797, 64
    %v801 = vpop.permute.xlu0 %800
    %v803 = vmul.f32 %v794, %v801
    %805 = vrot.lane.b32.xlu0 %v803, 64
    %v806 = vpop.permute.xlu0 %805
    %v808 = vadd.f32 %v798, %v806
    %v809 = vtanh.pop %v808
    %811 = vrot.lane.b32.xlu0 %v809, 64
    %v812 = vpop.permute.xlu0 %811
    %v814 = vmul.f32 %v796, %v812
    %v815 = vld [vmem:[%s340] sm:$0xff]
    %v816 = vld [vmem:[%s340 + $0x8] sm:$0xff]
    %v817 = vpack.c.bf16 %v814, %v814
    %v819 = vsel %vm149, %v817, 0
    %821 = vmatprep.subr.bf16.mxu0 %v566
    %822 = vmatpush1.bf16.msra.mxu0 %v565
    %823 = vmatprep.subr.bf16.mxu0 %v568
    %824 = vmatpush1.bf16.msra.mxu0 %v567
    %825 = vmatprep.subr.bf16.mxu0 %v570
    %826 = vmatpush1.bf16.msra.mxu0 %v569
    %827 = vmatprep.subr.bf16.mxu0 %v572
    %828 = vmatpush1.bf16.msra.mxu0 %v571
    %829 = vmatprep.subr.bf16.mxu0 0
    %830 = vmatpush1.bf16.msra.mxu0 0
    %831 = vmatprep.subr.bf16.mxu0 0
    %832 = vmatpush1.bf16.msra.mxu0 0
    %833 = vmatprep.subr.bf16.mxu0 0
    %834 = vmatpush1.bf16.msra.mxu0 0
    %835 = vmatprep.subr.bf16.mxu0 0
    %836 = vmatpush1.bf16.msra.mxu0 0
    %837 = vmatprep.subr.bf16.mxu0 0
    %838 = vmatpush1.bf16.msra.mxu0 0
    %839 = vmatprep.subr.bf16.mxu0 0
    %840 = vmatpush1.bf16.msra.mxu0 0
    %841 = vmatprep.subr.bf16.mxu0 0
    %842 = vmatpush1.bf16.msra.mxu0 0
    %843 = vmatprep.subr.bf16.mxu0 0
    %844 = vmatpush1.bf16.msra.mxu0 0
    %845 = vmatprep.subr.bf16.mxu0 0
    %846 = vmatpush1.bf16.msra.mxu0 0
    %847 = vmatprep.subr.bf16.mxu0 0
    %848 = vmatpush1.bf16.msra.mxu0 0
    %849 = vmatprep.subr.bf16.mxu0 0
    %850 = vmatpush1.bf16.msra.mxu0 0
    %851 = vmatprep.subr.bf16.mxu0 0
    %852 = vmatpush1.bf16.msra.mxu0 0
    %853 = vmatprep.mubr.bf16.mxu0 0
    %854 = vmatmul.mubr.bf16.gmra.mrb[0].mxu0 %v819
    %v855 = vpop.f32.mrb[0].mxu0
    %v856 = vadd.f32 0.0, %v855
    %v857 = vpop.f32.mrb[0].mxu0
    %v858 = vadd.f32 0.0, %v857
    %v859 = vpop.f32.mrb[0].mxu0
    %v860 = vpop.f32.mrb[0].mxu0
    %861 = vdwg.mxu0
    %v862 = vadd.f32 %v815, %v856
    %v863 = vadd.f32 %v816, %v858
    %v864 = vxor.u32 %v862, 2147483648
    %v865 = vxor.u32 %v863, 2147483648
    %v866 = vmul.f32 %v864, 1.442695
    %v867 = vpow.pop %v866
    %v868 = vmul.f32 %v865, 1.442695
    %v869 = vpow.pop %v868
    %v870 = vadd.f32 %v867, 1.0
    %v871 = vadd.f32 %v869, 1.0
    %v872 = vrcp.pop %v870
    %v873 = vmul.f32 1.0, %v872
    %v874 = vrcp.pop %v871
    %v875 = vmul.f32 1.0, %v874
    %v876 = vtanh.pop %v863
    %v877 = vmul.f32 %v873, %v808
    %879 = vrot.lane.b32.xlu0 %v876, 64
    %v880 = vpop.permute.xlu0 %879
    %v882 = vmul.f32 %v873, %v880
    %884 = vrot.lane.b32.xlu0 %v882, 64
    %v885 = vpop.permute.xlu0 %884
    %v887 = vadd.f32 %v877, %v885
    %v888 = vtanh.pop %v887
    %890 = vrot.lane.b32.xlu0 %v888, 64
    %v891 = vpop.permute.xlu0 %890
    %v893 = vmul.f32 %v875, %v891
    %v894 = vld [vmem:[%s389] sm:$0xff]
    %v895 = vld [vmem:[%s389 + $0x8] sm:$0xff]
    %v896 = vpack.c.bf16 %v893, %v893
    %v898 = vsel %vm149, %v896, 0
    %900 = vmatprep.subr.bf16.mxu0 %v566
    %901 = vmatpush1.bf16.msra.mxu0 %v565
    %902 = vmatprep.subr.bf16.mxu0 %v568
    %903 = vmatpush1.bf16.msra.mxu0 %v567
    %904 = vmatprep.subr.bf16.mxu0 %v570
    %905 = vmatpush1.bf16.msra.mxu0 %v569
    %906 = vmatprep.subr.bf16.mxu0 %v572
    %907 = vmatpush1.bf16.msra.mxu0 %v571
    %908 = vmatprep.subr.bf16.mxu0 0
    %909 = vmatpush1.bf16.msra.mxu0 0
    %910 = vmatprep.subr.bf16.mxu0 0
    %911 = vmatpush1.bf16.msra.mxu0 0
    %912 = vmatprep.subr.bf16.mxu0 0
    %913 = vmatpush1.bf16.msra.mxu0 0
    %914 = vmatprep.subr.bf16.mxu0 0
    %915 = vmatpush1.bf16.msra.mxu0 0
    %916 = vmatprep.subr.bf16.mxu0 0
    %917 = vmatpush1.bf16.msra.mxu0 0
    %918 = vmatprep.subr.bf16.mxu0 0
    %919 = vmatpush1.bf16.msra.mxu0 0
    %920 = vmatprep.subr.bf16.mxu0 0
    %921 = vmatpush1.bf16.msra.mxu0 0
    %922 = vmatprep.subr.bf16.mxu0 0
    %923 = vmatpush1.bf16.msra.mxu0 0
    %924 = vmatprep.subr.bf16.mxu0 0
    %925 = vmatpush1.bf16.msra.mxu0 0
    %926 = vmatprep.subr.bf16.mxu0 0
    %927 = vmatpush1.bf16.msra.mxu0 0
    %928 = vmatprep.subr.bf16.mxu0 0
    %929 = vmatpush1.bf16.msra.mxu0 0
    %930 = vmatprep.subr.bf16.mxu0 0
    %931 = vmatpush1.bf16.msra.mxu0 0
    %932 = vmatprep.mubr.bf16.mxu0 0
    %933 = vmatmul.mubr.bf16.gmra.mrb[0].mxu0 %v898
    %v934 = vpop.f32.mrb[0].mxu0
    %v935 = vadd.f32 0.0, %v934
    %v936 = vpop.f32.mrb[0].mxu0
    %v937 = vadd.f32 0.0, %v936
    %v938 = vpop.f32.mrb[0].mxu0
    %v939 = vpop.f32.mrb[0].mxu0
    %940 = vdwg.mxu0
    %v941 = vadd.f32 %v894, %v935
    %v942 = vadd.f32 %v895, %v937
    %v943 = vxor.u32 %v941, 2147483648
    %v944 = vxor.u32 %v942, 2147483648
    %v945 = vmul.f32 %v943, 1.442695
    %v946 = vpow.pop %v945
    %v947 = vmul.f32 %v944, 1.442695
    %v948 = vpow.pop %v947
    %v949 = vadd.f32 %v946, 1.0
    %v950 = vadd.f32 %v948, 1.0
    %v951 = vrcp.pop %v949
    %v952 = vmul.f32 1.0, %v951
    %v953 = vrcp.pop %v950
    %v954 = vmul.f32 1.0, %v953
    %v955 = vtanh.pop %v942
    %v956 = vmul.f32 %v952, %v887
    %958 = vrot.lane.b32.xlu0 %v955, 64
    %v959 = vpop.permute.xlu0 %958
    %v961 = vmul.f32 %v952, %v959
    %963 = vrot.lane.b32.xlu0 %v961, 64
    %v964 = vpop.permute.xlu0 %963
    %v966 = vadd.f32 %v956, %v964
    %v967 = vtanh.pop %v966
    %969 = vrot.lane.b32.xlu0 %v967, 64
    %v970 = vpop.permute.xlu0 %969
    %v972 = vmul.f32 %v954, %v970
    %v973 = vld [vmem:[%s438] sm:$0xff]
    %v974 = vld [vmem:[%s438 + $0x8] sm:$0xff]
    %v975 = vpack.c.bf16 %v972, %v972
    %v977 = vsel %vm149, %v975, 0
    %979 = vmatprep.subr.bf16.mxu0 %v566
    %980 = vmatpush1.bf16.msra.mxu0 %v565
    %981 = vmatprep.subr.bf16.mxu0 %v568
    %982 = vmatpush1.bf16.msra.mxu0 %v567
    %983 = vmatprep.subr.bf16.mxu0 %v570
    %984 = vmatpush1.bf16.msra.mxu0 %v569
    %985 = vmatprep.subr.bf16.mxu0 %v572
    %986 = vmatpush1.bf16.msra.mxu0 %v571
    %987 = vmatprep.subr.bf16.mxu0 0
    %988 = vmatpush1.bf16.msra.mxu0 0
    %989 = vmatprep.subr.bf16.mxu0 0
    %990 = vmatpush1.bf16.msra.mxu0 0
    %991 = vmatprep.subr.bf16.mxu0 0
    %992 = vmatpush1.bf16.msra.mxu0 0
    %993 = vmatprep.subr.bf16.mxu0 0
    %994 = vmatpush1.bf16.msra.mxu0 0
    %995 = vmatprep.subr.bf16.mxu0 0
    %996 = vmatpush1.bf16.msra.mxu0 0
    %997 = vmatprep.subr.bf16.mxu0 0
    %998 = vmatpush1.bf16.msra.mxu0 0
    %999 = vmatprep.subr.bf16.mxu0 0
    %1000 = vmatpush1.bf16.msra.mxu0 0
    %1001 = vmatprep.subr.bf16.mxu0 0
    %1002 = vmatpush1.bf16.msra.mxu0 0
    %1003 = vmatprep.subr.bf16.mxu0 0
    %1004 = vmatpush1.bf16.msra.mxu0 0
    %1005 = vmatprep.subr.bf16.mxu0 0
    %1006 = vmatpush1.bf16.msra.mxu0 0
    %1007 = vmatprep.subr.bf16.mxu0 0
    %1008 = vmatpush1.bf16.msra.mxu0 0
    %1009 = vmatprep.subr.bf16.mxu0 0
    %1010 = vmatpush1.bf16.msra.mxu0 0
    %1011 = vmatprep.mubr.bf16.mxu0 0
    %1012 = vmatmul.mubr.bf16.gmra.mrb[0].mxu0 %v977
    %v1013 = vpop.f32.mrb[0].mxu0
    %v1014 = vadd.f32 0.0, %v1013
    %v1015 = vpop.f32.mrb[0].mxu0
    %v1016 = vadd.f32 0.0, %v1015
    %v1017 = vpop.f32.mrb[0].mxu0
    %v1018 = vpop.f32.mrb[0].mxu0
    %1019 = vdwg.mxu0
    %v1020 = vadd.f32 %v973, %v1014
    %v1021 = vadd.f32 %v974, %v1016
    %v1022 = vxor.u32 %v1020, 2147483648
    %v1023 = vxor.u32 %v1021, 2147483648
    %v1024 = vmul.f32 %v1022, 1.442695
    %v1025 = vpow.pop %v1024
    %v1026 = vmul.f32 %v1023, 1.442695
    %v1027 = vpow.pop %v1026
    %v1028 = vadd.f32 %v1025, 1.0
    %v1029 = vadd.f32 %v1027, 1.0
    %v1030 = vrcp.pop %v1028
    %v1031 = vmul.f32 1.0, %v1030
    %v1032 = vrcp.pop %v1029
    %v1033 = vmul.f32 1.0, %v1032
    %v1034 = vtanh.pop %v1021
    %v1035 = vmul.f32 %v1031, %v966
    %1037 = vrot.lane.b32.xlu0 %v1034, 64
    %v1038 = vpop.permute.xlu0 %1037
    %v1040 = vmul.f32 %v1031, %v1038
    %1042 = vrot.lane.b32.xlu0 %v1040, 64
    %v1043 = vpop.permute.xlu0 %1042
    %v1045 = vadd.f32 %v1035, %v1043
    %v1046 = vtanh.pop %v1045
    %1048 = vrot.lane.b32.xlu0 %v1046, 64
    %v1049 = vpop.permute.xlu0 %1048
    %v1051 = vmul.f32 %v1033, %v1049
    %v1052 = vld [vmem:[%s487] sm:$0xff]
    %v1053 = vld [vmem:[%s487 + $0x8] sm:$0xff]
    %v1054 = vpack.c.bf16 %v1051, %v1051
    %v1056 = vsel %vm149, %v1054, 0
    %1058 = vmatprep.subr.bf16.mxu0 %v566
    %1059 = vmatpush1.bf16.msra.mxu0 %v565
    %1060 = vmatprep.subr.bf16.mxu0 %v568
    %1061 = vmatpush1.bf16.msra.mxu0 %v567
    %1062 = vmatprep.subr.bf16.mxu0 %v570
    %1063 = vmatpush1.bf16.msra.mxu0 %v569
    %1064 = vmatprep.subr.bf16.mxu0 %v572
    %1065 = vmatpush1.bf16.msra.mxu0 %v571
    %1066 = vmatprep.subr.bf16.mxu0 0
    %1067 = vmatpush1.bf16.msra.mxu0 0
    %1068 = vmatprep.subr.bf16.mxu0 0
    %1069 = vmatpush1.bf16.msra.mxu0 0
    %1070 = vmatprep.subr.bf16.mxu0 0
    %1071 = vmatpush1.bf16.msra.mxu0 0
    %1072 = vmatprep.subr.bf16.mxu0 0
    %1073 = vmatpush1.bf16.msra.mxu0 0
    %1074 = vmatprep.subr.bf16.mxu0 0
    %1075 = vmatpush1.bf16.msra.mxu0 0
    %1076 = vmatprep.subr.bf16.mxu0 0
    %1077 = vmatpush1.bf16.msra.mxu0 0
    %1078 = vmatprep.subr.bf16.mxu0 0
    %1079 = vmatpush1.bf16.msra.mxu0 0
    %1080 = vmatprep.subr.bf16.mxu0 0
    %1081 = vmatpush1.bf16.msra.mxu0 0
    %1082 = vmatprep.subr.bf16.mxu0 0
    %1083 = vmatpush1.bf16.msra.mxu0 0
    %1084 = vmatprep.subr.bf16.mxu0 0
    %1085 = vmatpush1.bf16.msra.mxu0 0
    %1086 = vmatprep.subr.bf16.mxu0 0
    %1087 = vmatpush1.bf16.msra.mxu0 0
    %1088 = vmatprep.subr.bf16.mxu0 0
    %1089 = vmatpush1.bf16.msra.mxu0 0
    %1090 = vmatprep.mubr.bf16.mxu0 0
    %1091 = vmatmul.mubr.bf16.gmra.mrb[0].mxu0 %v1056
    %v1092 = vpop.f32.mrb[0].mxu0
    %v1093 = vadd.f32 0.0, %v1092
    %v1094 = vpop.f32.mrb[0].mxu0
    %v1095 = vadd.f32 0.0, %v1094
    %v1096 = vpop.f32.mrb[0].mxu0
    %v1097 = vpop.f32.mrb[0].mxu0
    %1098 = vdwg.mxu0
    %v1099 = vadd.f32 %v1052, %v1093
    %v1100 = vadd.f32 %v1053, %v1095
    %v1101 = vxor.u32 %v1099, 2147483648
    %v1102 = vxor.u32 %v1100, 2147483648
    %v1103 = vmul.f32 %v1101, 1.442695
    %v1104 = vpow.pop %v1103
    %v1105 = vmul.f32 %v1102, 1.442695
    %v1106 = vpow.pop %v1105
    %v1107 = vadd.f32 %v1104, 1.0
    %v1108 = vadd.f32 %v1106, 1.0
    %v1109 = vrcp.pop %v1107
    %v1110 = vmul.f32 1.0, %v1109
    %v1111 = vrcp.pop %v1108
    %v1112 = vmul.f32 1.0, %v1111
    %v1113 = vtanh.pop %v1100
    %v1114 = vmul.f32 %v1110, %v1045
    %1116 = vrot.lane.b32.xlu0 %v1113, 64
    %v1117 = vpop.permute.xlu0 %1116
    %v1119 = vmul.f32 %v1110, %v1117
    %1121 = vrot.lane.b32.xlu0 %v1119, 64
    %v1122 = vpop.permute.xlu0 %1121
    %v1124 = vadd.f32 %v1114, %v1122
    %v1125 = vtanh.pop %v1124
    %1127 = vrot.lane.b32.xlu0 %v1125, 64
    %v1128 = vpop.permute.xlu0 %1127
    %v1130 = vmul.f32 %v1112, %v1128
    %v1131 = vld [vmem:[%s536] sm:$0xff]
    %v1132 = vld [vmem:[%s536 + $0x8] sm:$0xff]
    %v1133 = vpack.c.bf16 %v1130, %v1130
    %v1135 = vsel %vm149, %v1133, 0
    %1137 = vmatprep.subr.bf16.mxu0 %v566
    %1138 = vmatpush1.bf16.msra.mxu0 %v565
    %1139 = vmatprep.subr.bf16.mxu0 %v568
    %1140 = vmatpush1.bf16.msra.mxu0 %v567
    %1141 = vmatprep.subr.bf16.mxu0 %v570
    %1142 = vmatpush1.bf16.msra.mxu0 %v569
    %1143 = vmatprep.subr.bf16.mxu0 %v572
    %1144 = vmatpush1.bf16.msra.mxu0 %v571
    %1145 = vmatprep.subr.bf16.mxu0 0
    %1146 = vmatpush1.bf16.msra.mxu0 0
    %1147 = vmatprep.subr.bf16.mxu0 0
    %1148 = vmatpush1.bf16.msra.mxu0 0
    %1149 = vmatprep.subr.bf16.mxu0 0
    %1150 = vmatpush1.bf16.msra.mxu0 0
    %1151 = vmatprep.subr.bf16.mxu0 0
    %1152 = vmatpush1.bf16.msra.mxu0 0
    %1153 = vmatprep.subr.bf16.mxu0 0
    %1154 = vmatpush1.bf16.msra.mxu0 0
    %1155 = vmatprep.subr.bf16.mxu0 0
    %1156 = vmatpush1.bf16.msra.mxu0 0
    %1157 = vmatprep.subr.bf16.mxu0 0
    %1158 = vmatpush1.bf16.msra.mxu0 0
    %1159 = vmatprep.subr.bf16.mxu0 0
    %1160 = vmatpush1.bf16.msra.mxu0 0
    %1161 = vmatprep.subr.bf16.mxu0 0
    %1162 = vmatpush1.bf16.msra.mxu0 0
    %1163 = vmatprep.subr.bf16.mxu0 0
    %1164 = vmatpush1.bf16.msra.mxu0 0
    %1165 = vmatprep.subr.bf16.mxu0 0
    %1166 = vmatpush1.bf16.msra.mxu0 0
    %1167 = vmatprep.subr.bf16.mxu0 0
    %1168 = vmatpush1.bf16.msra.mxu0 0
    %1169 = vmatprep.mubr.bf16.mxu0 0
    %1170 = vmatmul.mubr.bf16.gmra.mrb[0].mxu0 %v1135
    %v1171 = vpop.f32.mrb[0].mxu0
    %v1172 = vadd.f32 0.0, %v1171
    %v1173 = vpop.f32.mrb[0].mxu0
    %v1174 = vadd.f32 0.0, %v1173
    %v1175 = vpop.f32.mrb[0].mxu0
    %v1176 = vpop.f32.mrb[0].mxu0
    %1177 = vdwg.mxu0
    %v1178 = vadd.f32 %v1131, %v1172
    %v1179 = vadd.f32 %v1132, %v1174
    %v1180 = vxor.u32 %v1178, 2147483648
    %v1181 = vxor.u32 %v1179, 2147483648
    %v1182 = vmul.f32 %v1180, 1.442695
    %v1183 = vpow.pop %v1182
    %v1184 = vmul.f32 %v1181, 1.442695
    %v1185 = vpow.pop %v1184
    %v1186 = vadd.f32 %v1183, 1.0
    %v1187 = vadd.f32 %v1185, 1.0
    %v1188 = vrcp.pop %v1186
    %v1189 = vmul.f32 1.0, %v1188
    %v1190 = vrcp.pop %v1187
    %v1191 = vmul.f32 1.0, %v1190
    %v1192 = vtanh.pop %v1179
    %v1193 = vmul.f32 %v1189, %v1124
    %1195 = vrot.lane.b32.xlu0 %v1192, 64
    %v1196 = vpop.permute.xlu0 %1195
    %v1198 = vmul.f32 %v1189, %v1196
    %1200 = vrot.lane.b32.xlu0 %v1198, 64
    %v1201 = vpop.permute.xlu0 %1200
    %v1203 = vadd.f32 %v1193, %v1201
    %v1204 = vtanh.pop %v1203
    %1206 = vrot.lane.b32.xlu0 %v1204, 64
    %v1207 = vpop.permute.xlu0 %1206
    %v1209 = vmul.f32 %v1191, %v1207
    %v1210 = vpack.c.bf16 %v1209, %v1209
    %v1211 = vld [vmem:[#allocation9] sm:$0xf]
    %v1212 = vld [vmem:[#allocation9 + $0x4] sm:$0xf]
    %v1213 = vld [vmem:[#allocation9 + $0x8] sm:$0xf]
    %v1214 = vld [vmem:[#allocation9 + $0xc] sm:$0xf]
    %v1215 = vld [vmem:[#allocation9 + $0x10] sm:$0xf]
    %v1216 = vld [vmem:[#allocation9 + $0x14] sm:$0xf]
    %v1217 = vld [vmem:[#allocation9 + $0x18] sm:$0xf]
    %v1218 = vld [vmem:[#allocation9 + $0x1c] sm:$0xf]
    %v1219 = vld [vmem:[%s5] sm:$0x1]
    %v1221 = vlaneseq
    %v1222 = vshrl.u32 %v1221, 7
    %v1223 = vsub.s32 0, %v1222
    %v1224 = vrot.slane %v1219, %v1223
    %v1234 = vunpack.c.l.b16 %v1211
    %v1235 = vunpack.c.l.b16 %v1212
    %v1236 = vunpack.c.l.b16 %v1213
    %v1237 = vunpack.c.l.b16 %v1214
    %v1238 = vunpack.c.l.b16 %v1215
    %v1239 = vunpack.c.l.b16 %v1216
    %v1240 = vunpack.c.l.b16 %v1217
    %v1241 = vunpack.c.l.b16 %v1218
    %v1242 = vpack.c.b16 %v1235, %v1234
    %v1243 = vpack.c.b16 %v1237, %v1236
    %v1244 = vpack.c.b16 %v1239, %v1238
    %v1245 = vpack.c.b16 %v1241, %v1240
    %v1251 = vsel %vm149, %v1210, 0
    %1253 = vmatprep.subr.bf16.mxu0 0
    %1254 = vmatpush1.bf16.msra.mxu0 %v1242
    %1255 = vmatprep.subr.bf16.mxu0 0
    %1256 = vmatpush1.bf16.msra.mxu0 %v1243
    %1257 = vmatprep.subr.bf16.mxu0 0
    %1258 = vmatpush1.bf16.msra.mxu0 %v1244
    %1259 = vmatprep.subr.bf16.mxu0 0
    %1260 = vmatpush1.bf16.msra.mxu0 %v1245
    %1261 = vmatprep.subr.bf16.mxu0 0
    %1262 = vmatpush1.bf16.msra.mxu0 0
    %1263 = vmatprep.subr.bf16.mxu0 0
    %1264 = vmatpush1.bf16.msra.mxu0 0
    %1265 = vmatprep.subr.bf16.mxu0 0
    %1266 = vmatpush1.bf16.msra.mxu0 0
    %1267 = vmatprep.subr.bf16.mxu0 0
    %1268 = vmatpush1.bf16.msra.mxu0 0
    %1269 = vmatprep.subr.bf16.mxu0 0
    %1270 = vmatpush1.bf16.msra.mxu0 0
    %1271 = vmatprep.subr.bf16.mxu0 0
    %1272 = vmatpush1.bf16.msra.mxu0 0
    %1273 = vmatprep.subr.bf16.mxu0 0
    %1274 = vmatpush1.bf16.msra.mxu0 0
    %1275 = vmatprep.subr.bf16.mxu0 0
    %1276 = vmatpush1.bf16.msra.mxu0 0
    %1277 = vmatprep.subr.bf16.mxu0 0
    %1278 = vmatpush1.bf16.msra.mxu0 0
    %1279 = vmatprep.subr.bf16.mxu0 0
    %1280 = vmatpush1.bf16.msra.mxu0 0
    %1281 = vmatprep.subr.bf16.mxu0 0
    %1282 = vmatpush1.bf16.msra.mxu0 0
    %1283 = vmatprep.subr.bf16.mxu0 0
    %1284 = vmatpush1.bf16.msra.mxu0 0
    %1285 = vmatprep.mubr.bf16.mxu0 0
    %1286 = vmatmul.mubr.bf16.gmra.mrb[0].mxu0 %v1251
    %v1287 = vpop.f32.mrb[0].mxu0
    %v1288 = vadd.f32 %v1224, %v1287
    %v1289 = vpop.f32.mrb[0].mxu0
    %v1290 = vpop.f32.mrb[0].mxu0
    %v1291 = vpop.f32.mrb[0].mxu0
    %1292 = vdwg.mxu0
    %1293 = vst [vmem:[#allocation11] sm:$0xff] %v1288
    // Predicated region
    $region42: #{tpu_custom_call.1} parent=1 // pred_check
      _
    $region43: #{tpu_custom_call.1} parent=1 // pred_check_branch
      %1295 = sbr.rel (0) target = $region45
    $region44: #{tpu_custom_call.1} parent=1 // pred_region
      %s1297 = ssub.s32 128, 128
      %1298 = vsyncadd [#allocation5], %s1297
      %s1300 = sshll.u32 [#allocation11], 4
      %s1301 = int_to_ptr.vmem [resolvable:$true] %s1300
      %1303 = dma.vmem_to_hbm [thread:$0]  %s1301, 128, %s6, [#allocation5]
    $region45: #{tpu_custom_call.1} parent=1 // pred_fallthru
      _
    // Predicated region
    $region46: #{tpu_custom_call.1} parent=1 // pred_check
      _
    $region47: #{tpu_custom_call.1} parent=1 // pred_check_branch
      %1305 = sbr.rel (0) target = $region49
    $region48: #{tpu_custom_call.1} parent=1 // pred_region
      %1306 = dma.done [#allocation5], 128
    $region49: #{tpu_custom_call.1} parent=1 // pred_fallthru
      _
    %1307 = vsyncpa [#allocation4], 1
    %1308 = vsyncpa [#allocation7], 1
    %1309 = vsyncpa [#allocation10], 1
    %1310 = vsyncpa [#allocation5], 1

</llo_original>
